<compile_context>
chip_gen: v7x
topology: tpu7x:2x2x1
jax: 0.10.0
libtpu: 0.0.40
codegen_flags: <defaults>
</compile_context>

<pallas_src>
import functools

import jax
import jax.numpy as jnp
from jax.experimental import pallas as pl
from jax.experimental.pallas import tpu as pltpu


# ---------------------------------------------------------------------------
# Kernel: conv (implicit im2col, taps folded into K, single MXU dot)
#         + fused ELU + fused per-tile BatchNorm partial statistics.
#   x_ref : (Cin, halo, Wp)   channel-major halo block of the padded input (bf16)
#   w_ref : (C4, ks*ks*Cin)   conv weight, K ordered as (di, dj, cin)      (bf16)
#   y_ref : (C4, th*Wo)       ELU(conv), channel-major / lane-dense        (bf16)
#   ps_ref: (C4, 2)           per-tile [sum, sum of squares]               (f32)
# ---------------------------------------------------------------------------
def _conv_elu_stats_kernel(x_ref, w_ref, y_ref, ps_ref, *, ks, th, wo):
    x = x_ref[...]                              # (Cin, halo, Wp)
    cin = x.shape[0]
    m = th * wo
    # Implicit im2col: K-folded patch slab built in VMEM only.  The dj shifts
    # are lane-axis slices (W is the lane dim); no HBM im2col materialization.
    taps = []
    for di in range(ks):
        for dj in range(ks):
            taps.append(x[:, di:di + th, dj:dj + wo].reshape(cin, m))
    patch = jnp.concatenate(taps, axis=0)       # (ks*ks*Cin, th*Wo)
    # Single MXU matmul, f32 accumulation, result already channel-major.
    acc = jnp.dot(w_ref[...], patch, preferred_element_type=jnp.float32)  # (C4, m)
    # ELU(alpha=1) in f32: x if x > 0 else exp(x) - 1 (clamped exp arg).
    act = jnp.where(acc > 0.0, acc, jnp.exp(jnp.minimum(acc, 0.0)) - 1.0)
    # Fused BatchNorm partial statistics (y is never re-read from HBM for stats).
    ps_ref[...] = jnp.concatenate(
        [jnp.sum(act, axis=1, keepdims=True),
         jnp.sum(act * act, axis=1, keepdims=True)], axis=1)   # (C4, 2)
    # Lane-dense store, no transpose needed (acc is already (C4, th*Wo)).
    y_ref[...] = act.astype(y_ref.dtype)


# ---------------------------------------------------------------------------
# Generation-aware tuning defaults.
# ---------------------------------------------------------------------------
def _tpu_defaults():
    kind = ""
    try:
        kind = jax.devices()[0].device_kind.lower()
    except Exception:
        pass
    single_core = ("v5" in kind) or ("v6" in kind)
    if single_core:
        # v5e/v6e: 128 MiB physical VMEM, one TensorCore -> bigger tiles,
        # higher scoped-VMEM limit, no need for >=2 grid steps.
        return dict(row_tile_positions=4096,
                    vmem_limit_bytes=96 * 1024 * 1024,
                    min_grid_steps=1)
    # v7x (and unknown): 64 MiB VMEM, 2 TensorCores -> conservative tiles and
    # keep >= 2 parallel grid steps so both cores get work.
    return dict(row_tile_positions=1024,
                vmem_limit_bytes=32 * 1024 * 1024,
                min_grid_steps=2)


def _choose_row_tile(ho, wo, batch, cap_positions, min_steps):
    """Largest row tile th dividing Ho with th*Wo <= cap_positions; if the
    parallel grid would have fewer than min_steps steps, split further
    (keeping th*Wo a multiple of 128 for lane-dense output blocks)."""
    cap = max(1, cap_positions // max(wo, 1))
    divisors = [d for d in range(1, ho + 1) if ho % d == 0]
    cands = [d for d in divisors if d <= cap]
    th = max(cands) if cands else 1
    if batch * (ho // th) < min_steps:
        smaller = [d for d in cands
                   if batch * (ho // d) >= min_steps and (d * wo) % 128 == 0]
        if smaller:
            th = max(smaller)
    return th


def deconv_layer_forward(x_nchw, weight, gamma, beta, *, ks=3, shuffle=2,
                         pad=1, compute_dtype=jnp.bfloat16,
                         row_tile_positions=None, vmem_limit_bytes=None,
                         min_grid_steps=None):
    """DeconvLayer forward: conv(stride=1, pad=1, no bias) -> ELU ->
    BatchNorm2d (training-mode batch stats) -> PixelShuffle(shuffle)."""
    defaults = _tpu_defaults()
    if row_tile_positions is None:
        row_tile_positions = defaults["row_tile_positions"]
    if vmem_limit_bytes is None:
        vmem_limit_bytes = defaults["vmem_limit_bytes"]
    if min_grid_steps is None:
        min_grid_steps = defaults["min_grid_steps"]

    N, Cin, H, W = x_nchw.shape
    C4 = weight.shape[0]
    assert weight.shape == (C4, Cin, ks, ks)
    assert C4 % (shuffle * shuffle) == 0
    Cout = C4 // (shuffle * shuffle)

    # Conv inside DeconvLayer's ConvLayer always uses stride=1 (default).
    Ho = H + 2 * pad - ks + 1
    Wo = W + 2 * pad - ks + 1
    Wp = W + 2 * pad

    th = _choose_row_tile(Ho, Wo, N, row_tile_positions, min_grid_steps)
    n_tiles = Ho // th
    tm = th * Wo                       # output positions per grid step
    M = N * Ho * Wo
    if N * n_tiles > 1:
        assert tm % 128 == 0, (
            "row-tile * Wo must be a multiple of 128 for lane-dense tiles")
        # TODO(synk): generic masking/padding for shapes where no row tile
        #             makes th*Wo a multiple of 128.
    halo = th + ks - 1

    # ---- glue: padded channel-major input, overlapping halo row tiles ------
    xp = jnp.pad(x_nchw.astype(compute_dtype),
                 ((0, 0), (0, 0), (pad, pad), (pad, pad)))   # (N, Cin, Hp, Wp)
    xt = jnp.stack([xp[:, :, i * th:i * th + halo, :] for i in range(n_tiles)],
                   axis=1)                                   # (N, n_tiles, Cin, halo, Wp)

    # weight (C4, Cin, kh, kw) -> (C4, kh*kw*Cin); K order (di, dj, cin)
    # matches the in-kernel patch-slab concat order.
    K = ks * ks * Cin
    w_k = jnp.transpose(weight, (0, 2, 3, 1)).reshape(C4, K).astype(compute_dtype)

    # ---- Pallas kernel: conv + ELU + BN partial sums ------------------------
    kernel = functools.partial(_conv_elu_stats_kernel, ks=ks, th=th, wo=Wo)
    y_t, partials = pl.pallas_call(
        kernel,
        out_shape=(
            jax.ShapeDtypeStruct((C4, M), compute_dtype),        # bf16 activation
            jax.ShapeDtypeStruct((N, n_tiles, C4, 2), jnp.float32),
        ),
        grid_spec=pltpu.PrefetchScalarGridSpec(
            num_scalar_prefetch=0,
            grid=(N, n_tiles),
            in_specs=[
                pl.BlockSpec((None, None, Cin, halo, Wp),
                             lambda n, i: (n, i, 0, 0, 0)),
                pl.BlockSpec((C4, K), lambda n, i: (0, 0)),
            ],
            out_specs=(
                pl.BlockSpec((C4, tm), lambda n, i: (0, n * n_tiles + i)),
                pl.BlockSpec((None, None, C4, 2), lambda n, i: (n, i, 0, 0)),
            ),
        ),
        compiler_params=pltpu.CompilerParams(
            dimension_semantics=("parallel", "parallel"),
            vmem_limit_bytes=vmem_limit_bytes),
    )(xt, w_k)

    # ---- tiny glue: reduce partial sums -> per-channel scale/shift ----------
    eps = 1e-5
    sums = jnp.sum(partials, axis=(0, 1))                  # (C4, 2)
    cnt = jnp.float32(M)
    mean = sums[:, 0] / cnt
    var = jnp.maximum(sums[:, 1] / cnt - mean * mean, 0.0)  # biased var (train BN)
    scale = gamma.astype(jnp.float32) * jax.lax.rsqrt(var + eps)
    shift = beta.astype(jnp.float32) - mean * scale

    # ---- BN apply + NCHW restore + PixelShuffle: one fused pass -------------
    # XLA fuses the upcast + per-channel affine into the transpose copy, so
    # the activation crosses HBM only twice after the kernel (read + write).
    r = shuffle
    y = y_t.astype(jnp.float32) * scale[:, None] + shift[:, None]   # (C4, M)
    y = y.reshape(Cout, r, r, N, Ho, Wo)
    out = jnp.transpose(y, (3, 0, 4, 1, 5, 2)).reshape(N, Cout, Ho * r, Wo * r)
    return out


# ---------------------------------------------------------------------------
# Pure-JAX reference (inputs cast to the same compute dtype as the kernel's
# matmul operands so the comparison is tight).
# ---------------------------------------------------------------------------
def _reference(x, weight, gamma, beta, *, ks, shuffle, pad, compute_dtype):
    xq = x.astype(compute_dtype).astype(jnp.float32)
    wq = weight.astype(compute_dtype).astype(jnp.float32)
    y = jax.lax.conv_general_dilated(
        xq, wq, window_strides=(1, 1), padding=((pad, pad), (pad, pad)),
        dimension_numbers=("NCHW", "OIHW", "NCHW"),
        preferred_element_type=jnp.float32)
    y = jax.nn.elu(y)
    mean = jnp.mean(y, axis=(0, 2, 3), keepdims=True)
    var = jnp.var(y, axis=(0, 2, 3), keepdims=True)
    y = (y - mean) * jax.lax.rsqrt(var + 1e-5) * gamma.reshape(1, -1, 1, 1) \
        + beta.reshape(1, -1, 1, 1)
    N, C4, H, W = y.shape
    r = shuffle
    c = C4 // (r * r)
    y = y.reshape(N, c, r, r, H, W)
    return jnp.transpose(y, (0, 1, 4, 2, 5, 3)).reshape(N, c, H * r, W * r)


if __name__ == "__main__":
    key = jax.random.PRNGKey(0)
    k_x, k_w, k_g, k_b = jax.random.split(key, 4)

    N, ch_in, H, W = 2, 4, 16, 16
    ch_out, ks, shuffle = 4, 3, 2
    C4 = shuffle * shuffle * ch_out            # conv output channels = 16

    x = jax.random.normal(k_x, (N, ch_in, H, W), dtype=jnp.float32)
    weight = jax.random.normal(k_w, (C4, ch_in, ks, ks), dtype=jnp.float32) * 0.1
    gamma = 1.0 + 0.1 * jax.random.normal(k_g, (C4,), dtype=jnp.float32)
    beta = 0.1 * jax.random.normal(k_b, (C4,), dtype=jnp.float32)

    fwd = jax.jit(functools.partial(deconv_layer_forward, ks=ks, shuffle=shuffle,
                                    compute_dtype=jnp.bfloat16))
    out = fwd(x, weight, gamma, beta)
    out = jax.block_until_ready(out)

    ref = _reference(x, weight, gamma, beta, ks=ks, shuffle=shuffle, pad=1,
                     compute_dtype=jnp.bfloat16)
    assert out.shape == (N, ch_out, H * shuffle, W * shuffle), out.shape
    max_err = float(jnp.max(jnp.abs(out - ref)))
    # Tolerance accounts for the bf16 storage of the pre-BN activation
    # (~2^-9 relative error, amplified by 1/sigma in the BN normalize).
    assert jnp.allclose(out, ref, rtol=5e-3, atol=5e-3), max_err

    print("KERNEL_OK")
</pallas_src>

<mosaic_0001>
module attributes {stable_mosaic.version = 11 : i64} {
  func.func @_conv_elu_stats_kernel(%arg0: i32, %arg1: i32, %arg2: memref<1x1x4x18x18xbf16, #tpu.memory_space<vmem>>, %arg3: memref<16x36xbf16, #tpu.memory_space<vmem>>, %arg4: memref<16x256xbf16, #tpu.memory_space<vmem>>, %arg5: memref<1x1x16x2xf32, #tpu.memory_space<vmem>>) attributes {dimension_semantics = [#tpu.dimension_semantics<parallel>, #tpu.dimension_semantics<parallel>], iteration_bounds = array<i64: 2, 1>, scalar_prefetch = 0 : i64, scratch_operands = 0 : i64, tpu.core_type = #tpu.core_type<tc>, window_params = [{transform_indices = @transform_0, window_bounds = array<i64: 1, 1, 4, 18, 18>}, {pipeline_mode = #tpu.pipeline_mode<synchronous>, transform_indices = @transform_1, window_bounds = array<i64: 16, 36>}, {transform_indices = @transform_2, window_bounds = array<i64: 16, 256>}, {transform_indices = @transform_3, window_bounds = array<i64: 1, 1, 16, 2>}]} {
    %c0 = arith.constant 0 : index
    %c0_0 = arith.constant 0 : index
    %c0_1 = arith.constant 0 : index
    %c0_2 = arith.constant 0 : index
    %c0_3 = arith.constant 0 : index
    %0 = vector.load %arg2[%c0, %c0_0, %c0_1, %c0_2, %c0_3] : memref<1x1x4x18x18xbf16, #tpu.memory_space<vmem>>, vector<1x1x4x18x18xbf16>
    %1 = vector.shape_cast %0 : vector<1x1x4x18x18xbf16> to vector<4x18x18xbf16>
    %2 = vector.extract_strided_slice %1 {offsets = [0, 0, 0], sizes = [4, 16, 16], strides = [1, 1, 1]} : vector<4x18x18xbf16> to vector<4x16x16xbf16>
    %3 = vector.shape_cast %2 : vector<4x16x16xbf16> to vector<4x256xbf16>
    %4 = vector.extract_strided_slice %1 {offsets = [0, 0, 1], sizes = [4, 16, 16], strides = [1, 1, 1]} : vector<4x18x18xbf16> to vector<4x16x16xbf16>
    %5 = vector.shape_cast %4 : vector<4x16x16xbf16> to vector<4x256xbf16>
    %6 = vector.extract_strided_slice %1 {offsets = [0, 0, 2], sizes = [4, 16, 16], strides = [1, 1, 1]} : vector<4x18x18xbf16> to vector<4x16x16xbf16>
    %7 = vector.shape_cast %6 : vector<4x16x16xbf16> to vector<4x256xbf16>
    %8 = vector.extract_strided_slice %1 {offsets = [0, 1, 0], sizes = [4, 16, 16], strides = [1, 1, 1]} : vector<4x18x18xbf16> to vector<4x16x16xbf16>
    %9 = vector.shape_cast %8 : vector<4x16x16xbf16> to vector<4x256xbf16>
    %10 = vector.extract_strided_slice %1 {offsets = [0, 1, 1], sizes = [4, 16, 16], strides = [1, 1, 1]} : vector<4x18x18xbf16> to vector<4x16x16xbf16>
    %11 = vector.shape_cast %10 : vector<4x16x16xbf16> to vector<4x256xbf16>
    %12 = vector.extract_strided_slice %1 {offsets = [0, 1, 2], sizes = [4, 16, 16], strides = [1, 1, 1]} : vector<4x18x18xbf16> to vector<4x16x16xbf16>
    %13 = vector.shape_cast %12 : vector<4x16x16xbf16> to vector<4x256xbf16>
    %14 = vector.extract_strided_slice %1 {offsets = [0, 2, 0], sizes = [4, 16, 16], strides = [1, 1, 1]} : vector<4x18x18xbf16> to vector<4x16x16xbf16>
    %15 = vector.shape_cast %14 : vector<4x16x16xbf16> to vector<4x256xbf16>
    %16 = vector.extract_strided_slice %1 {offsets = [0, 2, 1], sizes = [4, 16, 16], strides = [1, 1, 1]} : vector<4x18x18xbf16> to vector<4x16x16xbf16>
    %17 = vector.shape_cast %16 : vector<4x16x16xbf16> to vector<4x256xbf16>
    %18 = vector.extract_strided_slice %1 {offsets = [0, 2, 2], sizes = [4, 16, 16], strides = [1, 1, 1]} : vector<4x18x18xbf16> to vector<4x16x16xbf16>
    %19 = vector.shape_cast %18 : vector<4x16x16xbf16> to vector<4x256xbf16>
    %20 = tpu.concatenate %3, %5, %7, %9, %11, %13, %15, %17, %19 in 0 : vector<4x256xbf16>, vector<4x256xbf16>, vector<4x256xbf16>, vector<4x256xbf16>, vector<4x256xbf16>, vector<4x256xbf16>, vector<4x256xbf16>, vector<4x256xbf16>, vector<4x256xbf16> -> vector<36x256xbf16>
    %c0_4 = arith.constant 0 : index
    %c0_5 = arith.constant 0 : index
    %21 = vector.load %arg3[%c0_4, %c0_5] : memref<16x36xbf16, #tpu.memory_space<vmem>>, vector<16x36xbf16>
    %cst = arith.constant dense<0.000000e+00> : vector<16x256xf32>
    %22 = tpu.matmul %21, %20, %cst {dimension_numbers = #tpu.dot_dimension_numbers<[1], [0], [0], [1], [0, 0, 1, 1], [], []>} : vector<16x36xbf16>, vector<36x256xbf16>, vector<16x256xf32> -> vector<16x256xf32>
    %cst_6 = arith.constant 0.000000e+00 : f32
    %23 = vector.broadcast %cst_6 : f32 to vector<16x256xf32>
    %24 = arith.cmpf ogt, %22, %23 : vector<16x256xf32>
    %cst_7 = arith.constant 0.000000e+00 : f32
    %25 = vector.broadcast %cst_7 : f32 to vector<16x256xf32>
    %26 = arith.minimumf %22, %25 : vector<16x256xf32>
    %27 = math.exp %26 : vector<16x256xf32>
    %cst_8 = arith.constant 1.000000e+00 : f32
    %28 = vector.broadcast %cst_8 : f32 to vector<16x256xf32>
    %29 = arith.subf %27, %28 : vector<16x256xf32>
    %30 = arith.select %24, %22, %29 : vector<16x256xi1>, vector<16x256xf32>
    %cst_9 = arith.constant dense<0.000000e+00> : vector<16xf32>
    %31 = vector.multi_reduction <add>, %30, %cst_9 [1] : vector<16x256xf32> to vector<16xf32>
    %32 = vector.shape_cast %31 : vector<16xf32> to vector<16x1xf32>
    %33 = arith.mulf %30, %30 : vector<16x256xf32>
    %cst_10 = arith.constant dense<0.000000e+00> : vector<16xf32>
    %34 = vector.multi_reduction <add>, %33, %cst_10 [1] : vector<16x256xf32> to vector<16xf32>
    %35 = vector.shape_cast %34 : vector<16xf32> to vector<16x1xf32>
    %36 = tpu.concatenate %32, %35 in 1 : vector<16x1xf32>, vector<16x1xf32> -> vector<16x2xf32>
    %c0_11 = arith.constant 0 : index
    %c0_12 = arith.constant 0 : index
    %c0_13 = arith.constant 0 : index
    %c0_14 = arith.constant 0 : index
    %37 = vector.load %arg5[%c0_11, %c0_12, %c0_13, %c0_14] : memref<1x1x16x2xf32, #tpu.memory_space<vmem>>, vector<1x1x16x2xf32>
    %38 = vector.shape_cast %37 : vector<1x1x16x2xf32> to vector<16x2xf32>
    %39 = vector.shape_cast %36 : vector<16x2xf32> to vector<1x1x16x2xf32>
    tpu.vector_store %arg5[%c0_11, %c0_12, %c0_13, %c0_14], %39 {strides = array<i32>} : memref<1x1x16x2xf32, #tpu.memory_space<vmem>>, vector<1x1x16x2xf32>,
    %40 = arith.truncf %30 : vector<16x256xf32> to vector<16x256xbf16>
    %c0_15 = arith.constant 0 : index
    %c0_16 = arith.constant 0 : index
    %41 = vector.load %arg4[%c0_15, %c0_16] : memref<16x256xbf16, #tpu.memory_space<vmem>>, vector<16x256xbf16>
    tpu.vector_store %arg4[%c0_15, %c0_16], %40 {strides = array<i32>} : memref<16x256xbf16, #tpu.memory_space<vmem>>, vector<16x256xbf16>,
    return
  }
  func.func @transform_0(%arg0: i32, %arg1: i32) -> (i32, i32, i32, i32, i32) {
    %c0_i32 = arith.constant 0 : i32
    %c0_i32_0 = arith.constant 0 : i32
    %c0_i32_1 = arith.constant 0 : i32
    %c0_i32_2 = arith.constant 0 : i32
    return %arg0, %arg1, %c0_i32, %c0_i32_0, %c0_i32_1 : i32, i32, i32, i32, i32
  }
  func.func @transform_1(%arg0: i32, %arg1: i32) -> (i32, i32) {
    %c0_i32 = arith.constant 0 : i32
    %c0_i32_0 = arith.constant 0 : i32
    %c0_i32_1 = arith.constant 0 : i32
    return %c0_i32, %c0_i32_0 : i32, i32
  }
  func.func @transform_2(%arg0: i32, %arg1: i32) -> (i32, i32) {
    %c1_i32 = arith.constant 1 : i32
    %0 = arith.muli %arg0, %c1_i32 : i32
    %1 = arith.addi %0, %arg1 : i32
    %c0_i32 = arith.constant 0 : i32
    %c0_i32_0 = arith.constant 0 : i32
    return %c0_i32, %1 : i32, i32
  }
  func.func @transform_3(%arg0: i32, %arg1: i32) -> (i32, i32, i32, i32) {
    %c0_i32 = arith.constant 0 : i32
    %c0_i32_0 = arith.constant 0 : i32
    %c0_i32_1 = arith.constant 0 : i32
    return %arg0, %arg1, %c0_i32, %c0_i32_0 : i32, i32, i32, i32
  }
}

</mosaic_0001>

<llo_original>
// kernel: deconv_layer_forward.1
$region0: #{deconv_layer_forward.1}
  #allocation0 [shape = 'u32[]', space=smem, size = 0x4, offset = 0x4, fixed_abs, tag = 'smem constant byte address 0x4 - core index']
  #allocation1 [shape = 'u32[144,128]{1,0:T(1,128)}', space=vmem, size = 0x12000, scoped, tag = 'internal scratch']
  %s0 = inlined_call_operand.vmem [shape: bf16[2,1,4,18,18], index: 0, kind: input, shape index: {}]
  %s1 = inlined_call_operand.vmem [shape: bf16[16,36], index: 1, kind: input, shape index: {}]
  %s2 = inlined_call_operand.vmem [shape: bf16[16,512], index: 2, kind: output, shape index: {0}]
  %s3 = inlined_call_operand.vmem [shape: f32[2,1,16,2], index: 3, kind: output, shape index: {1}]
  %4 = xla_tuple %s2, %s3
  %s5 = sld [smem:[#allocation0]]
  $region83: #{deconv_layer_forward.1} parent=0
    _
  %s7 = ssub.s32 1, %s5
  %s8 = scalar_select 0, %s7, %s5
  $region1: #{deconv_layer_forward.1} parent=0
    #allocation2 [shape = 'u8[16384]{0}', space=vmem, size = 0x4000, scoped, tag = 'output window, operand 0']
    loop: start=0, step=1, limit=4
    $region2: #{deconv_layer_forward.1} parent=1 // loop_pre_header
      _
    $region3: #{deconv_layer_forward.1} parent=1 // loop_header
      %s10 = sphi 0, %s14
      %p11 = scmp.ge.s32.totalorder %s10, 4
      %s17 = sphi 0, %s29
      %s18 = sphi 0, %s25
      %s19 = sphi 0, %s17
      %s20 = sphi 0, %s18
      %s21 = sphi 0, %s19
      %s22 = sphi 0, %s20
      %s34 = sphi 0, %s36
      %s37 = sphi 0, %s34
      %s38 = sphi 0, %s37
      %s54 = sphi 0, %s38
      %s58 = sphi 0, %s58
      %s60 = sphi 0, %s58
      %s61 = sphi 0, %s60
      %s75 = sphi 0, %s61
      %s83 = sphi 0, %s85
      %s86 = sphi 0, %s83
      %s87 = sphi 0, %s86
      %s103 = sphi 0, %s87
      %s111 = sphi 0, %s113
      %s114 = sphi 0, %s111
      %s115 = sphi 0, %s114
      %s131 = sphi 0, %s115
    $region4: #{deconv_layer_forward.1} parent=1 // loop_header_branch
      %13 = sbr.rel (%p11) target = $region8
    $region5: #{deconv_layer_forward.1} parent=1 // loop_body
      %s15 = ssub.s32 %s10, 1
      %s16 = ssub.s32 %s10, 2
      %s23 = sadd.s32 1, %s18
      %p24 = scmp.ge.s32.totalorder %s23, 1
      %s25 = scalar_select %p24, 0, %s23
      %s26 = sadd.s32 1, %s17
      %s27 = scalar_select %p24, %s26, %s17
      %p28 = scmp.ge.s32.totalorder %s27, 2
      %s29 = scalar_select %p28, 0, %s27
      %s30 = ssub.s32 %s17, %s29
      %s31 = ssub.s32 %s18, %s25
      %s32 = sor.u32 %s30, %s31
      %p33 = scmp.eq.s32.totalorder %s32, 0
      %s35 = sadd.s32 %s34, 1
      %s36 = scalar_select %p33, %s34, %s35
      %p39 = pneg %p33
      %p40 = scmp.eq.s32.totalorder %s10, 1
      %p41 = por %p39, %p40
      %p42 = scmp.ne.s32.totalorder %s34, %s37
      %p43 = scmp.eq.s32.totalorder %s10, 0
      %p44 = por %p42, %p43
      %p45 = scmp.ne.s32.totalorder %s34, %s37
      %p46 = scmp.eq.s32.totalorder %s15, 1
      %p47 = por %p45, %p46
      %p48 = scmp.ne.s32.totalorder %s37, %s38
      %p49 = scmp.eq.s32.totalorder %s15, 0
      %p50 = por %p48, %p49
      %p51 = scmp.ne.s32.totalorder %s37, %s38
      %p52 = scmp.eq.s32.totalorder %s16, 1
      %p53 = por %p51, %p52
      %p55 = scmp.ne.s32.totalorder %s38, %s54
      %p56 = scmp.eq.s32.totalorder %s16, 0
      %p57 = por %p55, %p56
      %s59 = sadd.s32 %s58, 1
      %p62 = scmp.eq.s32.totalorder %s10, 1
      %p63 = scmp.ne.s32.totalorder %s58, %s60
      %p64 = scmp.eq.s32.totalorder %s10, 0
      %p65 = por %p63, %p64
      %p66 = scmp.ne.s32.totalorder %s58, %s60
      %p67 = scmp.eq.s32.totalorder %s15, 1
      %p68 = por %p66, %p67
      %p69 = scmp.ne.s32.totalorder %s60, %s61
      %p70 = scmp.eq.s32.totalorder %s15, 0
      %p71 = por %p69, %p70
      %p72 = scmp.ne.s32.totalorder %s60, %s61
      %p73 = scmp.eq.s32.totalorder %s16, 1
      %p74 = por %p72, %p73
      %p76 = scmp.ne.s32.totalorder %s61, %s75
      %p77 = scmp.eq.s32.totalorder %s16, 0
      %p78 = por %p76, %p77
      %s79 = sadd.s32 %s17, %s18
      %s80 = sadd.s32 %s29, %s25
      %s81 = ssub.s32 %s79, %s80
      %p82 = scmp.eq.s32.totalorder %s81, 0
      %s84 = sadd.s32 %s83, 1
      %s85 = scalar_select %p82, %s83, %s84
      %p88 = pneg %p82
      %p89 = scmp.eq.s32.totalorder %s10, 1
      %p90 = por %p88, %p89
      %p91 = scmp.ne.s32.totalorder %s83, %s86
      %p92 = scmp.eq.s32.totalorder %s10, 0
      %p93 = por %p91, %p92
      %p94 = scmp.ne.s32.totalorder %s83, %s86
      %p95 = scmp.eq.s32.totalorder %s15, 1
      %p96 = por %p94, %p95
      %p97 = scmp.ne.s32.totalorder %s86, %s87
      %p98 = scmp.eq.s32.totalorder %s15, 0
      %p99 = por %p97, %p98
      %p100 = scmp.ne.s32.totalorder %s86, %s87
      %p101 = scmp.eq.s32.totalorder %s16, 1
      %p102 = por %p100, %p101
      %p104 = scmp.ne.s32.totalorder %s87, %s103
      %p105 = scmp.eq.s32.totalorder %s16, 0
      %p106 = por %p104, %p105
      %s107 = ssub.s32 %s17, %s29
      %s108 = ssub.s32 %s18, %s25
      %s109 = sor.u32 %s107, %s108
      %p110 = scmp.eq.s32.totalorder %s109, 0
      %s112 = sadd.s32 %s111, 1
      %s113 = scalar_select %p110, %s111, %s112
      %p116 = pneg %p110
      %p117 = scmp.eq.s32.totalorder %s10, 1
      %p118 = por %p116, %p117
      %p119 = scmp.ne.s32.totalorder %s111, %s114
      %p120 = scmp.eq.s32.totalorder %s10, 0
      %p121 = por %p119, %p120
      %p122 = scmp.ne.s32.totalorder %s111, %s114
      %p123 = scmp.eq.s32.totalorder %s15, 1
      %p124 = por %p122, %p123
      %p125 = scmp.ne.s32.totalorder %s114, %s115
      %p126 = scmp.eq.s32.totalorder %s15, 0
      %p127 = por %p125, %p126
      %p128 = scmp.ne.s32.totalorder %s114, %s115
      %p129 = scmp.eq.s32.totalorder %s16, 1
      %p130 = por %p128, %p129
      %p132 = scmp.ne.s32.totalorder %s115, %s131
      %p133 = scmp.eq.s32.totalorder %s16, 0
      %p134 = por %p132, %p133
      %p135 = scmp.le.s32.totalorder 1, %s10
      %p136 = scmp.lt.s32.totalorder %s10, 3
      %p137 = pnand %p135, %p136
      %p138 = pneg %p137
      // Predicated region
      $region9: #{deconv_layer_forward.1} parent=5 // pred_check
        _
      $region10: #{deconv_layer_forward.1} parent=5 // pred_check_branch
        %140 = sbr.rel (%p137) target = $region12
      $region11: #{deconv_layer_forward.1} parent=5 // pred_region
        %s141 = ssub.s32 %s10, 1
        // Predicated region
        $region13: #{deconv_layer_forward.1} parent=11 // pred_check
          %p142 = pneg %p71
        $region14: #{deconv_layer_forward.1} parent=11 // pred_check_branch
          %144 = sbr.rel (%p142) target = $region16
        $region15: #{deconv_layer_forward.1} parent=11 // pred_region
          _
        $region16: #{deconv_layer_forward.1} parent=11 // pred_fallthru
          _
      $region12: #{deconv_layer_forward.1} parent=5 // pred_fallthru
        _
      %p145 = scmp.lt.s32.totalorder %s10, 2
      // Predicated region
      $region17: #{deconv_layer_forward.1} parent=5 // pred_check
        %p146 = pneg %p145
      $region18: #{deconv_layer_forward.1} parent=5 // pred_check_branch
        %148 = sbr.rel (%p146) target = $region20
      $region19: #{deconv_layer_forward.1} parent=5 // pred_region
        // Predicated region
        $region21: #{deconv_layer_forward.1} parent=19 // pred_check
          %p149 = pneg %p44
        $region22: #{deconv_layer_forward.1} parent=19 // pred_check_branch
          %151 = sbr.rel (%p149) target = $region24
        $region23: #{deconv_layer_forward.1} parent=19 // pred_region
          %p152 = scmp.lt.s32.totalorder %s17, 1
          %s153 = scalar_select %p152, %s17, 1
          %p154 = scmp.lt.s32.totalorder %s18, 0
          %s155 = scalar_select %p154, %s18, 0
          %s156 = smul.addr %s155, 12
          %s157 = smul.addr %s153, 12
          %s158 = sadd.s32 %s156, %s157
          %s159 = smul.addr %s158, 4
          %s160 = scalar_lea.vmem %s0, %s159
        $region24: #{deconv_layer_forward.1} parent=19 // pred_fallthru
          _
      $region20: #{deconv_layer_forward.1} parent=5 // pred_fallthru
        _
      %p161 = scmp.le.s32.totalorder 1, %s10
      %p162 = scmp.lt.s32.totalorder %s10, 3
      %p163 = pnand %p161, %p162
      %p164 = pneg %p163
      // Predicated region
      $region25: #{deconv_layer_forward.1} parent=5 // pred_check
        _
      $region26: #{deconv_layer_forward.1} parent=5 // pred_check_branch
        %166 = sbr.rel (%p163) target = $region28
      $region27: #{deconv_layer_forward.1} parent=5 // pred_region
        %s167 = ssub.s32 %s10, 1
        %p168 = scmp.lt.s32.totalorder %s19, 1
        %s169 = scalar_select %p168, %s19, 1
        %p170 = scmp.lt.s32.totalorder %s20, 0
        %s171 = scalar_select %p170, %s20, 0
        %s172 = smul.addr %s171, 12
        %s173 = smul.addr %s169, 12
        %s174 = sadd.s32 %s172, %s173
        %s175 = smul.addr %s174, 4
        %s176 = scalar_lea.vmem %s0, %s175
        %p177 = pneg %p50
        %p178 = pneg %p47
        %p179 = pneg %p71
        %p180 = pneg %p68
        %p181 = pneg %p99
        %p182 = pneg %p96
        %s183 = sand.u32 %s86, 1
        %s184 = sand.u32 %s86, 1
        %s185 = smul.addr %s184, 16
        %s186 = scalar_lea.vmem [#allocation2], %s185
        %p187 = pneg %p127
        %p188 = pneg %p124
        %p189 = scmp.lt.s32.totalorder %s19, 1
        %s190 = scalar_select %p189, %s19, 1
        %p191 = scmp.lt.s32.totalorder %s20, 0
        %s192 = scalar_select %p191, %s20, 0
        %s193 = smul.addr %s192, 2
        %s194 = smul.addr %s190, 2
        %s195 = sadd.s32 %s193, %s194
        %s196 = smul.addr %s195, 8
        %s197 = scalar_lea.vmem %s3, %s196
        %p198 = scmp.lt.s32.totalorder %s19, 1
        %s199 = scalar_select %p198, %s19, 1
        %p200 = scmp.lt.s32.totalorder %s20, 0
        %s201 = scalar_select %p200, %s20, 0
        %s202 = smul.addr %s201, 12
        %s203 = smul.addr %s199, 12
        %s204 = sadd.s32 %s202, %s203
        %s205 = smul.addr %s204, 4
        %s206 = scalar_lea.vmem %s0, %s205
        %s207 = sadd.s32 %s19, %s20
        %s208 = smul.u32 2, %s207
        %p209 = scmp.lt.s32.totalorder %s19, 1
        %s210 = scalar_select %p209, %s19, 1
        %p211 = scmp.lt.s32.totalorder %s20, 0
        %s212 = scalar_select %p211, %s20, 0
        %s213 = smul.addr %s212, 2
        %s214 = smul.addr %s210, 2
        %s215 = sadd.s32 %s213, %s214
        %s216 = smul.addr %s215, 8
        %s217 = scalar_lea.vmem %s3, %s216
        %v219 = vld [vmem:[%s206] sm:$0xf]
        %v220 = vld [vmem:[%s206 + $0x4] sm:$0xf]
        %v221 = vld [vmem:[%s206 + $0x8] sm:$0x1]
        %v222 = vld [vmem:[%s206 + $0xc] sm:$0xf]
        %v223 = vld [vmem:[%s206 + $0x10] sm:$0xf]
        %v224 = vld [vmem:[%s206 + $0x14] sm:$0x1]
        %v225 = vld [vmem:[%s206 + $0x18] sm:$0xf]
        %v226 = vld [vmem:[%s206 + $0x1c] sm:$0xf]
        %v227 = vld [vmem:[%s206 + $0x20] sm:$0x1]
        %v228 = vld [vmem:[%s206 + $0x24] sm:$0xf]
        %v229 = vld [vmem:[%s206 + $0x28] sm:$0xf]
        %v230 = vld [vmem:[%s206 + $0x2c] sm:$0x1]
        %v233 = vpack.i.b16 %v222, %v219
        %v234 = vshrl.u32 %v219, 16
        %v235 = vshrl.u32 %v222, 16
        %v236 = vpack.i.b16 %v235, %v234
        %v239 = vpack.i.b16 %v228, %v225
        %v240 = vshrl.u32 %v225, 16
        %v241 = vshrl.u32 %v228, 16
        %v242 = vpack.i.b16 %v241, %v240
        %v245 = vpack.i.b16 %v223, %v220
        %v246 = vshrl.u32 %v220, 16
        %v247 = vshrl.u32 %v223, 16
        %v248 = vpack.i.b16 %v247, %v246
        %v251 = vpack.i.b16 %v229, %v226
        %v252 = vshrl.u32 %v226, 16
        %v253 = vshrl.u32 %v229, 16
        %v254 = vpack.i.b16 %v253, %v252
        %v257 = vunpack.c.l.s4 1983009808
        %v258 = vunpack.c.0.s8 %v257
        %v259 = vlaneseq
        %v260 = vshrl.u32 %v259, 7
        %v261 = vsub.s32 %v258, %v260
        %v262 = vrot.slane %v233, %v261
        %v265 = vunpack.c.l.s4 1983009808
        %v266 = vunpack.c.0.s8 %v265
        %v267 = vlaneseq
        %v268 = vshrl.u32 %v267, 7
        %v269 = vsub.s32 %v266, %v268
        %v270 = vrot.slane %v239, %v269
        %v271 = vcombine.low %v262, %v270
        %v272 = vcombine.high %v262, %v270
        %v274 = vunpack.c.l.s4 1934713408
        %v275 = vunpack.c.0.s8 %v274
        %v276 = vlaneseq
        %v277 = vshrl.u32 %v276, 7
        %v278 = vsub.s32 %v275, %v277
        %v279 = vrot.slane %v271, %v278
        %v281 = vunpack.c.l.s4 1934713408
        %v282 = vunpack.c.0.s8 %v281
        %v283 = vlaneseq
        %v284 = vshrl.u32 %v283, 7
        %v285 = vsub.s32 %v282, %v284
        %v286 = vrot.slane %v272, %v285
        %v287 = vcombine.high %v279, 0
        %v288 = vcombine.high %v286, 0
        %v291 = vunpack.c.l.s4 1983009808
        %v292 = vunpack.c.0.s8 %v291
        %v293 = vlaneseq
        %v294 = vshrl.u32 %v293, 7
        %v295 = vsub.s32 %v292, %v294
        %v296 = vrot.slane %v236, %v295
        %v299 = vunpack.c.l.s4 1983009808
        %v300 = vunpack.c.0.s8 %v299
        %v301 = vlaneseq
        %v302 = vshrl.u32 %v301, 7
        %v303 = vsub.s32 %v300, %v302
        %v304 = vrot.slane %v242, %v303
        %v305 = vcombine.low %v296, %v304
        %v306 = vcombine.high %v296, %v304
        %v308 = vunpack.c.l.s4 1934713408
        %v309 = vunpack.c.0.s8 %v308
        %v310 = vlaneseq
        %v311 = vshrl.u32 %v310, 7
        %v312 = vsub.s32 %v309, %v311
        %v313 = vrot.slane %v305, %v312
        %v315 = vunpack.c.l.s4 1934713408
        %v316 = vunpack.c.0.s8 %v315
        %v317 = vlaneseq
        %v318 = vshrl.u32 %v317, 7
        %v319 = vsub.s32 %v316, %v318
        %v320 = vrot.slane %v306, %v319
        %v321 = vcombine.high %v313, 0
        %v322 = vcombine.high %v320, 0
        %v325 = vunpack.c.l.s4 1983009808
        %v326 = vunpack.c.0.s8 %v325
        %v327 = vlaneseq
        %v328 = vshrl.u32 %v327, 7
        %v329 = vsub.s32 %v326, %v328
        %v330 = vrot.slane %v245, %v329
        %v333 = vunpack.c.l.s4 1983009808
        %v334 = vunpack.c.0.s8 %v333
        %v335 = vlaneseq
        %v336 = vshrl.u32 %v335, 7
        %v337 = vsub.s32 %v334, %v336
        %v338 = vrot.slane %v251, %v337
        %v339 = vcombine.low %v330, %v338
        %v340 = vcombine.high %v330, %v338
        %v342 = vunpack.c.l.s4 1934713408
        %v343 = vunpack.c.0.s8 %v342
        %v344 = vlaneseq
        %v345 = vshrl.u32 %v344, 7
        %v346 = vsub.s32 %v343, %v345
        %v347 = vrot.slane %v339, %v346
        %v349 = vunpack.c.l.s4 1934713408
        %v350 = vunpack.c.0.s8 %v349
        %v351 = vlaneseq
        %v352 = vshrl.u32 %v351, 7
        %v353 = vsub.s32 %v350, %v352
        %v354 = vrot.slane %v340, %v353
        %v355 = vcombine.high %v347, 0
        %v356 = vcombine.high %v354, 0
        %v359 = vunpack.c.l.s4 1983009808
        %v360 = vunpack.c.0.s8 %v359
        %v361 = vlaneseq
        %v362 = vshrl.u32 %v361, 7
        %v363 = vsub.s32 %v360, %v362
        %v364 = vrot.slane %v248, %v363
        %v367 = vunpack.c.l.s4 1983009808
        %v368 = vunpack.c.0.s8 %v367
        %v369 = vlaneseq
        %v370 = vshrl.u32 %v369, 7
        %v371 = vsub.s32 %v368, %v370
        %v372 = vrot.slane %v254, %v371
        %v373 = vcombine.low %v364, %v372
        %v374 = vcombine.high %v364, %v372
        %v376 = vunpack.c.l.s4 1934713408
        %v377 = vunpack.c.0.s8 %v376
        %v378 = vlaneseq
        %v379 = vshrl.u32 %v378, 7
        %v380 = vsub.s32 %v377, %v379
        %v381 = vrot.slane %v373, %v380
        %v383 = vunpack.c.l.s4 1934713408
        %v384 = vunpack.c.0.s8 %v383
        %v385 = vlaneseq
        %v386 = vshrl.u32 %v385, 7
        %v387 = vsub.s32 %v384, %v386
        %v388 = vrot.slane %v374, %v387
        %v389 = vcombine.high %v381, 0
        %v390 = vcombine.high %v388, 0
        %v392 = vunpack.c.l.b16 %v313
        %v393 = vpack.c.b16 %v392, %v392
        %394 = vrot.lane.b32.xlu0 %v393, 16
        %v395 = vpop.permute.xlu0 %394
        %v397 = vunpack.c.l.b16 %v287
        %v398 = vpack.c.b16 %v397, %v397
        %399 = vrot.lane.b32.xlu0 %v398, 32
        %v400 = vpop.permute.xlu0 %399
        %v402 = vunpack.c.l.b16 %v321
        %v403 = vpack.c.b16 %v402, %v402
        %404 = vrot.lane.b32.xlu0 %v403, 48
        %v405 = vpop.permute.xlu0 %404
        %v407 = vunpack.c.l.b16 %v286
        %v408 = vpack.c.b16 %v407, %v407
        %409 = vrot.lane.b32.xlu0 %v408, 64
        %v410 = vpop.permute.xlu0 %409
        %v412 = vunpack.c.l.b16 %v320
        %v413 = vpack.c.b16 %v412, %v412
        %414 = vrot.lane.b32.xlu0 %v413, 80
        %v415 = vpop.permute.xlu0 %414
        %v417 = vunpack.c.l.b16 %v288
        %v418 = vpack.c.b16 %v417, %v417
        %419 = vrot.lane.b32.xlu0 %v418, 96
        %v420 = vpop.permute.xlu0 %419
        %v422 = vunpack.c.l.b16 %v322
        %v423 = vpack.c.b16 %v422, %v422
        %424 = vrot.lane.b32.xlu0 %v423, 112
        %v425 = vpop.permute.xlu0 %424
        %v427 = vunpack.c.l.b16 %v381
        %v428 = vpack.c.b16 %v427, %v427
        %429 = vrot.lane.b32.xlu0 %v428, 16
        %v430 = vpop.permute.xlu0 %429
        %v432 = vunpack.c.l.b16 %v355
        %v433 = vpack.c.b16 %v432, %v432
        %434 = vrot.lane.b32.xlu0 %v433, 32
        %v435 = vpop.permute.xlu0 %434
        %v437 = vunpack.c.l.b16 %v389
        %v438 = vpack.c.b16 %v437, %v437
        %439 = vrot.lane.b32.xlu0 %v438, 48
        %v440 = vpop.permute.xlu0 %439
        %v442 = vunpack.c.l.b16 %v354
        %v443 = vpack.c.b16 %v442, %v442
        %444 = vrot.lane.b32.xlu0 %v443, 64
        %v445 = vpop.permute.xlu0 %444
        %v447 = vunpack.c.l.b16 %v388
        %v448 = vpack.c.b16 %v447, %v447
        %449 = vrot.lane.b32.xlu0 %v448, 80
        %v450 = vpop.permute.xlu0 %449
        %v452 = vunpack.c.l.b16 %v356
        %v453 = vpack.c.b16 %v452, %v452
        %454 = vrot.lane.b32.xlu0 %v453, 96
        %v455 = vpop.permute.xlu0 %454
        %v457 = vunpack.c.l.b16 %v390
        %v458 = vpack.c.b16 %v457, %v457
        %459 = vrot.lane.b32.xlu0 %v458, 112
        %v460 = vpop.permute.xlu0 %459
        %vm461 = vcmask 130048
        %v464 = vsel %vm461, %v279, %v395
        %vm465 = vcmask 261120
        %v467 = vsel %vm465, %v464, %v400
        %vm468 = vcmask 392192
        %v470 = vsel %vm468, %v467, %v405
        %vm471 = vcmask 523264
        %v473 = vsel %vm471, %v470, %v410
        %vm474 = vcmask 654336
        %v476 = vsel %vm474, %v473, %v415
        %vm477 = vcmask 785408
        %v479 = vsel %vm477, %v476, %v420
        %vm480 = vcmask 916480
        %v482 = vsel %vm480, %v479, %v425
        %v485 = vsel %vm461, %v347, %v430
        %v487 = vsel %vm465, %v485, %v435
        %v489 = vsel %vm468, %v487, %v440
        %v491 = vsel %vm471, %v489, %v445
        %v493 = vsel %vm474, %v491, %v450
        %v495 = vsel %vm477, %v493, %v455
        %v497 = vsel %vm480, %v495, %v460
        %506 = vrot.lane.b32.xlu0 %v219, 127
        %v507 = vpop.permute.xlu0 %506
        %508 = vrot.lane.b32.xlu0 %v220, 127
        %v509 = vpop.permute.xlu0 %508
        %510 = vrot.lane.b32.xlu0 %v222, 127
        %v511 = vpop.permute.xlu0 %510
        %512 = vrot.lane.b32.xlu0 %v223, 127
        %v513 = vpop.permute.xlu0 %512
        %514 = vrot.lane.b32.xlu0 %v225, 127
        %v515 = vpop.permute.xlu0 %514
        %516 = vrot.lane.b32.xlu0 %v226, 127
        %v517 = vpop.permute.xlu0 %516
        %518 = vrot.lane.b32.xlu0 %v228, 127
        %v519 = vpop.permute.xlu0 %518
        %520 = vrot.lane.b32.xlu0 %v229, 127
        %v521 = vpop.permute.xlu0 %520
        %v524 = vpack.i.b16 %v511, %v507
        %v525 = vshrl.u32 %v507, 16
        %v526 = vshrl.u32 %v511, 16
        %v527 = vpack.i.b16 %v526, %v525
        %v530 = vpack.i.b16 %v519, %v515
        %v531 = vshrl.u32 %v515, 16
        %v532 = vshrl.u32 %v519, 16
        %v533 = vpack.i.b16 %v532, %v531
        %v536 = vpack.i.b16 %v513, %v509
        %v537 = vshrl.u32 %v509, 16
        %v538 = vshrl.u32 %v513, 16
        %v539 = vpack.i.b16 %v538, %v537
        %v542 = vpack.i.b16 %v521, %v517
        %v543 = vshrl.u32 %v517, 16
        %v544 = vshrl.u32 %v521, 16
        %v545 = vpack.i.b16 %v544, %v543
        %v548 = vunpack.c.l.s4 1983009808
        %v549 = vunpack.c.0.s8 %v548
        %v550 = vlaneseq
        %v551 = vshrl.u32 %v550, 7
        %v552 = vsub.s32 %v549, %v551
        %v553 = vrot.slane %v524, %v552
        %v556 = vunpack.c.l.s4 1983009808
        %v557 = vunpack.c.0.s8 %v556
        %v558 = vlaneseq
        %v559 = vshrl.u32 %v558, 7
        %v560 = vsub.s32 %v557, %v559
        %v561 = vrot.slane %v530, %v560
        %v562 = vcombine.low %v553, %v561
        %v563 = vcombine.high %v553, %v561
        %v565 = vunpack.c.l.s4 1934713408
        %v566 = vunpack.c.0.s8 %v565
        %v567 = vlaneseq
        %v568 = vshrl.u32 %v567, 7
        %v569 = vsub.s32 %v566, %v568
        %v570 = vrot.slane %v562, %v569
        %v572 = vunpack.c.l.s4 1934713408
        %v573 = vunpack.c.0.s8 %v572
        %v574 = vlaneseq
        %v575 = vshrl.u32 %v574, 7
        %v576 = vsub.s32 %v573, %v575
        %v577 = vrot.slane %v563, %v576
        %v578 = vcombine.high %v570, 0
        %v579 = vcombine.high %v577, 0
        %v582 = vunpack.c.l.s4 1983009808
        %v583 = vunpack.c.0.s8 %v582
        %v584 = vlaneseq
        %v585 = vshrl.u32 %v584, 7
        %v586 = vsub.s32 %v583, %v585
        %v587 = vrot.slane %v527, %v586
        %v590 = vunpack.c.l.s4 1983009808
        %v591 = vunpack.c.0.s8 %v590
        %v592 = vlaneseq
        %v593 = vshrl.u32 %v592, 7
        %v594 = vsub.s32 %v591, %v593
        %v595 = vrot.slane %v533, %v594
        %v596 = vcombine.low %v587, %v595
        %v597 = vcombine.high %v587, %v595
        %v599 = vunpack.c.l.s4 1934713408
        %v600 = vunpack.c.0.s8 %v599
        %v601 = vlaneseq
        %v602 = vshrl.u32 %v601, 7
        %v603 = vsub.s32 %v600, %v602
        %v604 = vrot.slane %v596, %v603
        %v606 = vunpack.c.l.s4 1934713408
        %v607 = vunpack.c.0.s8 %v606
        %v608 = vlaneseq
        %v609 = vshrl.u32 %v608, 7
        %v610 = vsub.s32 %v607, %v609
        %v611 = vrot.slane %v597, %v610
        %v612 = vcombine.high %v604, 0
        %v613 = vcombine.high %v611, 0
        %v616 = vunpack.c.l.s4 1983009808
        %v617 = vunpack.c.0.s8 %v616
        %v618 = vlaneseq
        %v619 = vshrl.u32 %v618, 7
        %v620 = vsub.s32 %v617, %v619
        %v621 = vrot.slane %v536, %v620
        %v624 = vunpack.c.l.s4 1983009808
        %v625 = vunpack.c.0.s8 %v624
        %v626 = vlaneseq
        %v627 = vshrl.u32 %v626, 7
        %v628 = vsub.s32 %v625, %v627
        %v629 = vrot.slane %v542, %v628
        %v630 = vcombine.low %v621, %v629
        %v631 = vcombine.high %v621, %v629
        %v633 = vunpack.c.l.s4 1934713408
        %v634 = vunpack.c.0.s8 %v633
        %v635 = vlaneseq
        %v636 = vshrl.u32 %v635, 7
        %v637 = vsub.s32 %v634, %v636
        %v638 = vrot.slane %v630, %v637
        %v640 = vunpack.c.l.s4 1934713408
        %v641 = vunpack.c.0.s8 %v640
        %v642 = vlaneseq
        %v643 = vshrl.u32 %v642, 7
        %v644 = vsub.s32 %v641, %v643
        %v645 = vrot.slane %v631, %v644
        %v646 = vcombine.high %v638, 0
        %v647 = vcombine.high %v645, 0
        %v650 = vunpack.c.l.s4 1983009808
        %v651 = vunpack.c.0.s8 %v650
        %v652 = vlaneseq
        %v653 = vshrl.u32 %v652, 7
        %v654 = vsub.s32 %v651, %v653
        %v655 = vrot.slane %v539, %v654
        %v658 = vunpack.c.l.s4 1983009808
        %v659 = vunpack.c.0.s8 %v658
        %v660 = vlaneseq
        %v661 = vshrl.u32 %v660, 7
        %v662 = vsub.s32 %v659, %v661
        %v663 = vrot.slane %v545, %v662
        %v664 = vcombine.low %v655, %v663
        %v665 = vcombine.high %v655, %v663
        %v667 = vunpack.c.l.s4 1934713408
        %v668 = vunpack.c.0.s8 %v667
        %v669 = vlaneseq
        %v670 = vshrl.u32 %v669, 7
        %v671 = vsub.s32 %v668, %v670
        %v672 = vrot.slane %v664, %v671
        %v674 = vunpack.c.l.s4 1934713408
        %v675 = vunpack.c.0.s8 %v674
        %v676 = vlaneseq
        %v677 = vshrl.u32 %v676, 7
        %v678 = vsub.s32 %v675, %v677
        %v679 = vrot.slane %v665, %v678
        %v680 = vcombine.high %v672, 0
        %v681 = vcombine.high %v679, 0
        %v683 = vunpack.c.l.b16 %v604
        %v684 = vpack.c.b16 %v683, %v683
        %685 = vrot.lane.b32.xlu0 %v684, 16
        %v686 = vpop.permute.xlu0 %685
        %v688 = vunpack.c.l.b16 %v578
        %v689 = vpack.c.b16 %v688, %v688
        %690 = vrot.lane.b32.xlu0 %v689, 32
        %v691 = vpop.permute.xlu0 %690
        %v693 = vunpack.c.l.b16 %v612
        %v694 = vpack.c.b16 %v693, %v693
        %695 = vrot.lane.b32.xlu0 %v694, 48
        %v696 = vpop.permute.xlu0 %695
        %v698 = vunpack.c.l.b16 %v577
        %v699 = vpack.c.b16 %v698, %v698
        %700 = vrot.lane.b32.xlu0 %v699, 64
        %v701 = vpop.permute.xlu0 %700
        %v703 = vunpack.c.l.b16 %v611
        %v704 = vpack.c.b16 %v703, %v703
        %705 = vrot.lane.b32.xlu0 %v704, 80
        %v706 = vpop.permute.xlu0 %705
        %v708 = vunpack.c.l.b16 %v579
        %v709 = vpack.c.b16 %v708, %v708
        %710 = vrot.lane.b32.xlu0 %v709, 96
        %v711 = vpop.permute.xlu0 %710
        %v713 = vunpack.c.l.b16 %v613
        %v714 = vpack.c.b16 %v713, %v713
        %715 = vrot.lane.b32.xlu0 %v714, 112
        %v716 = vpop.permute.xlu0 %715
        %v718 = vunpack.c.l.b16 %v672
        %v719 = vpack.c.b16 %v718, %v718
        %720 = vrot.lane.b32.xlu0 %v719, 16
        %v721 = vpop.permute.xlu0 %720
        %v723 = vunpack.c.l.b16 %v646
        %v724 = vpack.c.b16 %v723, %v723
        %725 = vrot.lane.b32.xlu0 %v724, 32
        %v726 = vpop.permute.xlu0 %725
        %v728 = vunpack.c.l.b16 %v680
        %v729 = vpack.c.b16 %v728, %v728
        %730 = vrot.lane.b32.xlu0 %v729, 48
        %v731 = vpop.permute.xlu0 %730
        %v733 = vunpack.c.l.b16 %v645
        %v734 = vpack.c.b16 %v733, %v733
        %735 = vrot.lane.b32.xlu0 %v734, 64
        %v736 = vpop.permute.xlu0 %735
        %v738 = vunpack.c.l.b16 %v679
        %v739 = vpack.c.b16 %v738, %v738
        %740 = vrot.lane.b32.xlu0 %v739, 80
        %v741 = vpop.permute.xlu0 %740
        %v743 = vunpack.c.l.b16 %v647
        %v744 = vpack.c.b16 %v743, %v743
        %745 = vrot.lane.b32.xlu0 %v744, 96
        %v746 = vpop.permute.xlu0 %745
        %v748 = vunpack.c.l.b16 %v681
        %v749 = vpack.c.b16 %v748, %v748
        %750 = vrot.lane.b32.xlu0 %v749, 112
        %v751 = vpop.permute.xlu0 %750
        %v754 = vsel %vm461, %v570, %v686
        %v756 = vsel %vm465, %v754, %v691
        %v758 = vsel %vm468, %v756, %v696
        %v760 = vsel %vm471, %v758, %v701
        %v762 = vsel %vm474, %v760, %v706
        %v764 = vsel %vm477, %v762, %v711
        %v766 = vsel %vm480, %v764, %v716
        %v769 = vsel %vm461, %v638, %v721
        %v771 = vsel %vm465, %v769, %v726
        %v773 = vsel %vm468, %v771, %v731
        %v775 = vsel %vm471, %v773, %v736
        %v777 = vsel %vm474, %v775, %v741
        %v779 = vsel %vm477, %v777, %v746
        %v781 = vsel %vm480, %v779, %v751
        %782 = vrot.lane.b32.xlu0 %v219, 126
        %v783 = vpop.permute.xlu0 %782
        %784 = vrot.lane.b32.xlu0 %v220, 126
        %v785 = vpop.permute.xlu0 %784
        %786 = vrot.lane.b32.xlu0 %v222, 126
        %v787 = vpop.permute.xlu0 %786
        %788 = vrot.lane.b32.xlu0 %v223, 126
        %v789 = vpop.permute.xlu0 %788
        %790 = vrot.lane.b32.xlu0 %v225, 126
        %v791 = vpop.permute.xlu0 %790
        %792 = vrot.lane.b32.xlu0 %v226, 126
        %v793 = vpop.permute.xlu0 %792
        %794 = vrot.lane.b32.xlu0 %v228, 126
        %v795 = vpop.permute.xlu0 %794
        %796 = vrot.lane.b32.xlu0 %v229, 126
        %v797 = vpop.permute.xlu0 %796
        %v800 = vpack.i.b16 %v787, %v783
        %v801 = vshrl.u32 %v783, 16
        %v802 = vshrl.u32 %v787, 16
        %v803 = vpack.i.b16 %v802, %v801
        %v806 = vpack.i.b16 %v795, %v791
        %v807 = vshrl.u32 %v791, 16
        %v808 = vshrl.u32 %v795, 16
        %v809 = vpack.i.b16 %v808, %v807
        %v812 = vpack.i.b16 %v789, %v785
        %v813 = vshrl.u32 %v785, 16
        %v814 = vshrl.u32 %v789, 16
        %v815 = vpack.i.b16 %v814, %v813
        %v818 = vpack.i.b16 %v797, %v793
        %v819 = vshrl.u32 %v793, 16
        %v820 = vshrl.u32 %v797, 16
        %v821 = vpack.i.b16 %v820, %v819
        %v824 = vunpack.c.l.s4 1983009808
        %v825 = vunpack.c.0.s8 %v824
        %v826 = vlaneseq
        %v827 = vshrl.u32 %v826, 7
        %v828 = vsub.s32 %v825, %v827
        %v829 = vrot.slane %v800, %v828
        %v832 = vunpack.c.l.s4 1983009808
        %v833 = vunpack.c.0.s8 %v832
        %v834 = vlaneseq
        %v835 = vshrl.u32 %v834, 7
        %v836 = vsub.s32 %v833, %v835
        %v837 = vrot.slane %v806, %v836
        %v838 = vcombine.low %v829, %v837
        %v839 = vcombine.high %v829, %v837
        %v841 = vunpack.c.l.s4 1934713408
        %v842 = vunpack.c.0.s8 %v841
        %v843 = vlaneseq
        %v844 = vshrl.u32 %v843, 7
        %v845 = vsub.s32 %v842, %v844
        %v846 = vrot.slane %v838, %v845
        %v848 = vunpack.c.l.s4 1934713408
        %v849 = vunpack.c.0.s8 %v848
        %v850 = vlaneseq
        %v851 = vshrl.u32 %v850, 7
        %v852 = vsub.s32 %v849, %v851
        %v853 = vrot.slane %v839, %v852
        %v854 = vcombine.high %v846, 0
        %v855 = vcombine.high %v853, 0
        %v858 = vunpack.c.l.s4 1983009808
        %v859 = vunpack.c.0.s8 %v858
        %v860 = vlaneseq
        %v861 = vshrl.u32 %v860, 7
        %v862 = vsub.s32 %v859, %v861
        %v863 = vrot.slane %v803, %v862
        %v866 = vunpack.c.l.s4 1983009808
        %v867 = vunpack.c.0.s8 %v866
        %v868 = vlaneseq
        %v869 = vshrl.u32 %v868, 7
        %v870 = vsub.s32 %v867, %v869
        %v871 = vrot.slane %v809, %v870
        %v872 = vcombine.low %v863, %v871
        %v873 = vcombine.high %v863, %v871
        %v875 = vunpack.c.l.s4 1934713408
        %v876 = vunpack.c.0.s8 %v875
        %v877 = vlaneseq
        %v878 = vshrl.u32 %v877, 7
        %v879 = vsub.s32 %v876, %v878
        %v880 = vrot.slane %v872, %v879
        %v882 = vunpack.c.l.s4 1934713408
        %v883 = vunpack.c.0.s8 %v882
        %v884 = vlaneseq
        %v885 = vshrl.u32 %v884, 7
        %v886 = vsub.s32 %v883, %v885
        %v887 = vrot.slane %v873, %v886
        %v888 = vcombine.high %v880, 0
        %v889 = vcombine.high %v887, 0
        %v892 = vunpack.c.l.s4 1983009808
        %v893 = vunpack.c.0.s8 %v892
        %v894 = vlaneseq
        %v895 = vshrl.u32 %v894, 7
        %v896 = vsub.s32 %v893, %v895
        %v897 = vrot.slane %v812, %v896
        %v900 = vunpack.c.l.s4 1983009808
        %v901 = vunpack.c.0.s8 %v900
        %v902 = vlaneseq
        %v903 = vshrl.u32 %v902, 7
        %v904 = vsub.s32 %v901, %v903
        %v905 = vrot.slane %v818, %v904
        %v906 = vcombine.low %v897, %v905
        %v907 = vcombine.high %v897, %v905
        %v909 = vunpack.c.l.s4 1934713408
        %v910 = vunpack.c.0.s8 %v909
        %v911 = vlaneseq
        %v912 = vshrl.u32 %v911, 7
        %v913 = vsub.s32 %v910, %v912
        %v914 = vrot.slane %v906, %v913
        %v916 = vunpack.c.l.s4 1934713408
        %v917 = vunpack.c.0.s8 %v916
        %v918 = vlaneseq
        %v919 = vshrl.u32 %v918, 7
        %v920 = vsub.s32 %v917, %v919
        %v921 = vrot.slane %v907, %v920
        %v922 = vcombine.high %v914, 0
        %v923 = vcombine.high %v921, 0
        %v926 = vunpack.c.l.s4 1983009808
        %v927 = vunpack.c.0.s8 %v926
        %v928 = vlaneseq
        %v929 = vshrl.u32 %v928, 7
        %v930 = vsub.s32 %v927, %v929
        %v931 = vrot.slane %v815, %v930
        %v934 = vunpack.c.l.s4 1983009808
        %v935 = vunpack.c.0.s8 %v934
        %v936 = vlaneseq
        %v937 = vshrl.u32 %v936, 7
        %v938 = vsub.s32 %v935, %v937
        %v939 = vrot.slane %v821, %v938
        %v940 = vcombine.low %v931, %v939
        %v941 = vcombine.high %v931, %v939
        %v943 = vunpack.c.l.s4 1934713408
        %v944 = vunpack.c.0.s8 %v943
        %v945 = vlaneseq
        %v946 = vshrl.u32 %v945, 7
        %v947 = vsub.s32 %v944, %v946
        %v948 = vrot.slane %v940, %v947
        %v950 = vunpack.c.l.s4 1934713408
        %v951 = vunpack.c.0.s8 %v950
        %v952 = vlaneseq
        %v953 = vshrl.u32 %v952, 7
        %v954 = vsub.s32 %v951, %v953
        %v955 = vrot.slane %v941, %v954
        %v956 = vcombine.high %v948, 0
        %v957 = vcombine.high %v955, 0
        %v959 = vunpack.c.l.b16 %v880
        %v960 = vpack.c.b16 %v959, %v959
        %961 = vrot.lane.b32.xlu0 %v960, 16
        %v962 = vpop.permute.xlu0 %961
        %v964 = vunpack.c.l.b16 %v854
        %v965 = vpack.c.b16 %v964, %v964
        %966 = vrot.lane.b32.xlu0 %v965, 32
        %v967 = vpop.permute.xlu0 %966
        %v969 = vunpack.c.l.b16 %v888
        %v970 = vpack.c.b16 %v969, %v969
        %971 = vrot.lane.b32.xlu0 %v970, 48
        %v972 = vpop.permute.xlu0 %971
        %v974 = vunpack.c.l.b16 %v853
        %v975 = vpack.c.b16 %v974, %v974
        %976 = vrot.lane.b32.xlu0 %v975, 64
        %v977 = vpop.permute.xlu0 %976
        %v979 = vunpack.c.l.b16 %v887
        %v980 = vpack.c.b16 %v979, %v979
        %981 = vrot.lane.b32.xlu0 %v980, 80
        %v982 = vpop.permute.xlu0 %981
        %v984 = vunpack.c.l.b16 %v855
        %v985 = vpack.c.b16 %v984, %v984
        %986 = vrot.lane.b32.xlu0 %v985, 96
        %v987 = vpop.permute.xlu0 %986
        %v989 = vunpack.c.l.b16 %v889
        %v990 = vpack.c.b16 %v989, %v989
        %991 = vrot.lane.b32.xlu0 %v990, 112
        %v992 = vpop.permute.xlu0 %991
        %v994 = vunpack.c.l.b16 %v948
        %v995 = vpack.c.b16 %v994, %v994
        %996 = vrot.lane.b32.xlu0 %v995, 16
        %v997 = vpop.permute.xlu0 %996
        %v999 = vunpack.c.l.b16 %v922
        %v1000 = vpack.c.b16 %v999, %v999
        %1001 = vrot.lane.b32.xlu0 %v1000, 32
        %v1002 = vpop.permute.xlu0 %1001
        %v1004 = vunpack.c.l.b16 %v956
        %v1005 = vpack.c.b16 %v1004, %v1004
        %1006 = vrot.lane.b32.xlu0 %v1005, 48
        %v1007 = vpop.permute.xlu0 %1006
        %v1009 = vunpack.c.l.b16 %v921
        %v1010 = vpack.c.b16 %v1009, %v1009
        %1011 = vrot.lane.b32.xlu0 %v1010, 64
        %v1012 = vpop.permute.xlu0 %1011
        %v1014 = vunpack.c.l.b16 %v955
        %v1015 = vpack.c.b16 %v1014, %v1014
        %1016 = vrot.lane.b32.xlu0 %v1015, 80
        %v1017 = vpop.permute.xlu0 %1016
        %v1019 = vunpack.c.l.b16 %v923
        %v1020 = vpack.c.b16 %v1019, %v1019
        %1021 = vrot.lane.b32.xlu0 %v1020, 96
        %v1022 = vpop.permute.xlu0 %1021
        %v1024 = vunpack.c.l.b16 %v957
        %v1025 = vpack.c.b16 %v1024, %v1024
        %1026 = vrot.lane.b32.xlu0 %v1025, 112
        %v1027 = vpop.permute.xlu0 %1026
        %v1030 = vsel %vm461, %v846, %v962
        %v1032 = vsel %vm465, %v1030, %v967
        %v1034 = vsel %vm468, %v1032, %v972
        %v1036 = vsel %vm471, %v1034, %v977
        %v1038 = vsel %vm474, %v1036, %v982
        %v1040 = vsel %vm477, %v1038, %v987
        %v1042 = vsel %vm480, %v1040, %v992
        %v1045 = vsel %vm461, %v914, %v997
        %v1047 = vsel %vm465, %v1045, %v1002
        %v1049 = vsel %vm468, %v1047, %v1007
        %v1051 = vsel %vm471, %v1049, %v1012
        %v1053 = vsel %vm474, %v1051, %v1017
        %v1055 = vsel %vm477, %v1053, %v1022
        %v1057 = vsel %vm480, %v1055, %v1027
        %vm1058 = vsmask.f32 3328
        %vm1059 = vsmask.f32 7440
        %vm1060 = vmor %vm1058, %vm1059
        %v1062 = vrot.slane %v234, 4
        %v1063 = vshll.u32 %v219, 16
        %v1065 = vrot.slane %v1063, 5
        %v1066 = vor.u32 %v1062, %v1065
        %v1067 = vrot.slane %v1066, 4
        %v1068 = vshll.u32 %v220, 16
        %v1070 = vrot.slane %v1068, 5
        %v1071 = vsel %vm1060, %v1067, %v1070
        %v1073 = vrot.slane %v246, 4
        %v1074 = vor.u32 %v1073, %v1070
        %v1075 = vrot.slane %v1074, 4
        %v1077 = vshll.u32 %v221, 16
        %v1079 = vrot.slane %v1077, 5
        %v1080 = vsel %vm1060, %v1075, %v1079
        %v1082 = vrot.slane %v235, 4
        %v1083 = vshll.u32 %v222, 16
        %v1085 = vrot.slane %v1083, 5
        %v1086 = vor.u32 %v1082, %v1085
        %v1087 = vrot.slane %v1086, 4
        %v1088 = vshll.u32 %v223, 16
        %v1090 = vrot.slane %v1088, 5
        %v1091 = vsel %vm1060, %v1087, %v1090
        %v1093 = vrot.slane %v247, 4
        %v1094 = vor.u32 %v1093, %v1090
        %v1095 = vrot.slane %v1094, 4
        %v1097 = vshll.u32 %v224, 16
        %v1099 = vrot.slane %v1097, 5
        %v1100 = vsel %vm1060, %v1095, %v1099
        %v1102 = vrot.slane %v240, 4
        %v1103 = vshll.u32 %v225, 16
        %v1105 = vrot.slane %v1103, 5
        %v1106 = vor.u32 %v1102, %v1105
        %v1107 = vrot.slane %v1106, 4
        %v1108 = vshll.u32 %v226, 16
        %v1110 = vrot.slane %v1108, 5
        %v1111 = vsel %vm1060, %v1107, %v1110
        %v1113 = vrot.slane %v252, 4
        %v1114 = vor.u32 %v1113, %v1110
        %v1115 = vrot.slane %v1114, 4
        %v1117 = vshll.u32 %v227, 16
        %v1119 = vrot.slane %v1117, 5
        %v1120 = vsel %vm1060, %v1115, %v1119
        %v1122 = vrot.slane %v241, 4
        %v1123 = vshll.u32 %v228, 16
        %v1125 = vrot.slane %v1123, 5
        %v1126 = vor.u32 %v1122, %v1125
        %v1127 = vrot.slane %v1126, 4
        %v1128 = vshll.u32 %v229, 16
        %v1130 = vrot.slane %v1128, 5
        %v1131 = vsel %vm1060, %v1127, %v1130
        %v1133 = vrot.slane %v253, 4
        %v1134 = vor.u32 %v1133, %v1130
        %v1135 = vrot.slane %v1134, 4
        %v1137 = vshll.u32 %v230, 16
        %v1139 = vrot.slane %v1137, 5
        %v1140 = vsel %vm1060, %v1135, %v1139
        %v1143 = vpack.i.b16 %v1091, %v1071
        %v1144 = vshrl.u32 %v1071, 16
        %v1145 = vshrl.u32 %v1091, 16
        %v1146 = vpack.i.b16 %v1145, %v1144
        %v1149 = vpack.i.b16 %v1131, %v1111
        %v1150 = vshrl.u32 %v1111, 16
        %v1151 = vshrl.u32 %v1131, 16
        %v1152 = vpack.i.b16 %v1151, %v1150
        %v1155 = vpack.i.b16 %v1100, %v1080
        %v1156 = vshrl.u32 %v1080, 16
        %v1157 = vshrl.u32 %v1100, 16
        %v1158 = vpack.i.b16 %v1157, %v1156
        %v1161 = vpack.i.b16 %v1140, %v1120
        %v1162 = vshrl.u32 %v1120, 16
        %v1163 = vshrl.u32 %v1140, 16
        %v1164 = vpack.i.b16 %v1163, %v1162
        %v1167 = vunpack.c.l.s4 1983009808
        %v1168 = vunpack.c.0.s8 %v1167
        %v1169 = vlaneseq
        %v1170 = vshrl.u32 %v1169, 7
        %v1171 = vsub.s32 %v1168, %v1170
        %v1172 = vrot.slane %v1143, %v1171
        %v1175 = vunpack.c.l.s4 1983009808
        %v1176 = vunpack.c.0.s8 %v1175
        %v1177 = vlaneseq
        %v1178 = vshrl.u32 %v1177, 7
        %v1179 = vsub.s32 %v1176, %v1178
        %v1180 = vrot.slane %v1149, %v1179
        %v1181 = vcombine.low %v1172, %v1180
        %v1182 = vcombine.high %v1172, %v1180
        %v1184 = vunpack.c.l.s4 1934713408
        %v1185 = vunpack.c.0.s8 %v1184
        %v1186 = vlaneseq
        %v1187 = vshrl.u32 %v1186, 7
        %v1188 = vsub.s32 %v1185, %v1187
        %v1189 = vrot.slane %v1181, %v1188
        %v1191 = vunpack.c.l.s4 1934713408
        %v1192 = vunpack.c.0.s8 %v1191
        %v1193 = vlaneseq
        %v1194 = vshrl.u32 %v1193, 7
        %v1195 = vsub.s32 %v1192, %v1194
        %v1196 = vrot.slane %v1182, %v1195
        %v1197 = vcombine.high %v1189, 0
        %v1198 = vcombine.high %v1196, 0
        %v1201 = vunpack.c.l.s4 1983009808
        %v1202 = vunpack.c.0.s8 %v1201
        %v1203 = vlaneseq
        %v1204 = vshrl.u32 %v1203, 7
        %v1205 = vsub.s32 %v1202, %v1204
        %v1206 = vrot.slane %v1146, %v1205
        %v1209 = vunpack.c.l.s4 1983009808
        %v1210 = vunpack.c.0.s8 %v1209
        %v1211 = vlaneseq
        %v1212 = vshrl.u32 %v1211, 7
        %v1213 = vsub.s32 %v1210, %v1212
        %v1214 = vrot.slane %v1152, %v1213
        %v1215 = vcombine.low %v1206, %v1214
        %v1216 = vcombine.high %v1206, %v1214
        %v1218 = vunpack.c.l.s4 1934713408
        %v1219 = vunpack.c.0.s8 %v1218
        %v1220 = vlaneseq
        %v1221 = vshrl.u32 %v1220, 7
        %v1222 = vsub.s32 %v1219, %v1221
        %v1223 = vrot.slane %v1215, %v1222
        %v1225 = vunpack.c.l.s4 1934713408
        %v1226 = vunpack.c.0.s8 %v1225
        %v1227 = vlaneseq
        %v1228 = vshrl.u32 %v1227, 7
        %v1229 = vsub.s32 %v1226, %v1228
        %v1230 = vrot.slane %v1216, %v1229
        %v1231 = vcombine.high %v1223, 0
        %v1232 = vcombine.high %v1230, 0
        %v1235 = vunpack.c.l.s4 1983009808
        %v1236 = vunpack.c.0.s8 %v1235
        %v1237 = vlaneseq
        %v1238 = vshrl.u32 %v1237, 7
        %v1239 = vsub.s32 %v1236, %v1238
        %v1240 = vrot.slane %v1155, %v1239
        %v1243 = vunpack.c.l.s4 1983009808
        %v1244 = vunpack.c.0.s8 %v1243
        %v1245 = vlaneseq
        %v1246 = vshrl.u32 %v1245, 7
        %v1247 = vsub.s32 %v1244, %v1246
        %v1248 = vrot.slane %v1161, %v1247
        %v1249 = vcombine.low %v1240, %v1248
        %v1250 = vcombine.high %v1240, %v1248
        %v1252 = vunpack.c.l.s4 1934713408
        %v1253 = vunpack.c.0.s8 %v1252
        %v1254 = vlaneseq
        %v1255 = vshrl.u32 %v1254, 7
        %v1256 = vsub.s32 %v1253, %v1255
        %v1257 = vrot.slane %v1249, %v1256
        %v1259 = vunpack.c.l.s4 1934713408
        %v1260 = vunpack.c.0.s8 %v1259
        %v1261 = vlaneseq
        %v1262 = vshrl.u32 %v1261, 7
        %v1263 = vsub.s32 %v1260, %v1262
        %v1264 = vrot.slane %v1250, %v1263
        %v1265 = vcombine.high %v1257, 0
        %v1266 = vcombine.high %v1264, 0
        %v1269 = vunpack.c.l.s4 1983009808
        %v1270 = vunpack.c.0.s8 %v1269
        %v1271 = vlaneseq
        %v1272 = vshrl.u32 %v1271, 7
        %v1273 = vsub.s32 %v1270, %v1272
        %v1274 = vrot.slane %v1158, %v1273
        %v1277 = vunpack.c.l.s4 1983009808
        %v1278 = vunpack.c.0.s8 %v1277
        %v1279 = vlaneseq
        %v1280 = vshrl.u32 %v1279, 7
        %v1281 = vsub.s32 %v1278, %v1280
        %v1282 = vrot.slane %v1164, %v1281
        %v1283 = vcombine.low %v1274, %v1282
        %v1284 = vcombine.high %v1274, %v1282
        %v1286 = vunpack.c.l.s4 1934713408
        %v1287 = vunpack.c.0.s8 %v1286
        %v1288 = vlaneseq
        %v1289 = vshrl.u32 %v1288, 7
        %v1290 = vsub.s32 %v1287, %v1289
        %v1291 = vrot.slane %v1283, %v1290
        %v1293 = vunpack.c.l.s4 1934713408
        %v1294 = vunpack.c.0.s8 %v1293
        %v1295 = vlaneseq
        %v1296 = vshrl.u32 %v1295, 7
        %v1297 = vsub.s32 %v1294, %v1296
        %v1298 = vrot.slane %v1284, %v1297
        %v1299 = vcombine.high %v1291, 0
        %v1300 = vcombine.high %v1298, 0
        %v1302 = vunpack.c.l.b16 %v1223
        %v1303 = vpack.c.b16 %v1302, %v1302
        %1304 = vrot.lane.b32.xlu0 %v1303, 16
        %v1305 = vpop.permute.xlu0 %1304
        %v1307 = vunpack.c.l.b16 %v1197
        %v1308 = vpack.c.b16 %v1307, %v1307
        %1309 = vrot.lane.b32.xlu0 %v1308, 32
        %v1310 = vpop.permute.xlu0 %1309
        %v1312 = vunpack.c.l.b16 %v1231
        %v1313 = vpack.c.b16 %v1312, %v1312
        %1314 = vrot.lane.b32.xlu0 %v1313, 48
        %v1315 = vpop.permute.xlu0 %1314
        %v1317 = vunpack.c.l.b16 %v1196
        %v1318 = vpack.c.b16 %v1317, %v1317
        %1319 = vrot.lane.b32.xlu0 %v1318, 64
        %v1320 = vpop.permute.xlu0 %1319
        %v1322 = vunpack.c.l.b16 %v1230
        %v1323 = vpack.c.b16 %v1322, %v1322
        %1324 = vrot.lane.b32.xlu0 %v1323, 80
        %v1325 = vpop.permute.xlu0 %1324
        %v1327 = vunpack.c.l.b16 %v1198
        %v1328 = vpack.c.b16 %v1327, %v1327
        %1329 = vrot.lane.b32.xlu0 %v1328, 96
        %v1330 = vpop.permute.xlu0 %1329
        %v1332 = vunpack.c.l.b16 %v1232
        %v1333 = vpack.c.b16 %v1332, %v1332
        %1334 = vrot.lane.b32.xlu0 %v1333, 112
        %v1335 = vpop.permute.xlu0 %1334
        %v1337 = vunpack.c.l.b16 %v1291
        %v1338 = vpack.c.b16 %v1337, %v1337
        %1339 = vrot.lane.b32.xlu0 %v1338, 16
        %v1340 = vpop.permute.xlu0 %1339
        %v1342 = vunpack.c.l.b16 %v1265
        %v1343 = vpack.c.b16 %v1342, %v1342
        %1344 = vrot.lane.b32.xlu0 %v1343, 32
        %v1345 = vpop.permute.xlu0 %1344
        %v1347 = vunpack.c.l.b16 %v1299
        %v1348 = vpack.c.b16 %v1347, %v1347
        %1349 = vrot.lane.b32.xlu0 %v1348, 48
        %v1350 = vpop.permute.xlu0 %1349
        %v1352 = vunpack.c.l.b16 %v1264
        %v1353 = vpack.c.b16 %v1352, %v1352
        %1354 = vrot.lane.b32.xlu0 %v1353, 64
        %v1355 = vpop.permute.xlu0 %1354
        %v1357 = vunpack.c.l.b16 %v1298
        %v1358 = vpack.c.b16 %v1357, %v1357
        %1359 = vrot.lane.b32.xlu0 %v1358, 80
        %v1360 = vpop.permute.xlu0 %1359
        %v1362 = vunpack.c.l.b16 %v1266
        %v1363 = vpack.c.b16 %v1362, %v1362
        %1364 = vrot.lane.b32.xlu0 %v1363, 96
        %v1365 = vpop.permute.xlu0 %1364
        %v1367 = vunpack.c.l.b16 %v1300
        %v1368 = vpack.c.b16 %v1367, %v1367
        %1369 = vrot.lane.b32.xlu0 %v1368, 112
        %v1370 = vpop.permute.xlu0 %1369
        %v1373 = vsel %vm461, %v1189, %v1305
        %v1375 = vsel %vm465, %v1373, %v1310
        %v1377 = vsel %vm468, %v1375, %v1315
        %v1379 = vsel %vm471, %v1377, %v1320
        %v1381 = vsel %vm474, %v1379, %v1325
        %v1383 = vsel %vm477, %v1381, %v1330
        %v1385 = vsel %vm480, %v1383, %v1335
        %v1388 = vsel %vm461, %v1257, %v1340
        %v1390 = vsel %vm465, %v1388, %v1345
        %v1392 = vsel %vm468, %v1390, %v1350
        %v1394 = vsel %vm471, %v1392, %v1355
        %v1396 = vsel %vm474, %v1394, %v1360
        %v1398 = vsel %vm477, %v1396, %v1365
        %v1400 = vsel %vm480, %v1398, %v1370
        %1401 = vrot.lane.b32.xlu0 %v1071, 127
        %v1402 = vpop.permute.xlu0 %1401
        %1403 = vrot.lane.b32.xlu0 %v1080, 127
        %v1404 = vpop.permute.xlu0 %1403
        %1405 = vrot.lane.b32.xlu0 %v1091, 127
        %v1406 = vpop.permute.xlu0 %1405
        %1407 = vrot.lane.b32.xlu0 %v1100, 127
        %v1408 = vpop.permute.xlu0 %1407
        %1409 = vrot.lane.b32.xlu0 %v1111, 127
        %v1410 = vpop.permute.xlu0 %1409
        %1411 = vrot.lane.b32.xlu0 %v1120, 127
        %v1412 = vpop.permute.xlu0 %1411
        %1413 = vrot.lane.b32.xlu0 %v1131, 127
        %v1414 = vpop.permute.xlu0 %1413
        %1415 = vrot.lane.b32.xlu0 %v1140, 127
        %v1416 = vpop.permute.xlu0 %1415
        %v1419 = vpack.i.b16 %v1406, %v1402
        %v1420 = vshrl.u32 %v1402, 16
        %v1421 = vshrl.u32 %v1406, 16
        %v1422 = vpack.i.b16 %v1421, %v1420
        %v1425 = vpack.i.b16 %v1414, %v1410
        %v1426 = vshrl.u32 %v1410, 16
        %v1427 = vshrl.u32 %v1414, 16
        %v1428 = vpack.i.b16 %v1427, %v1426
        %v1431 = vpack.i.b16 %v1408, %v1404
        %v1432 = vshrl.u32 %v1404, 16
        %v1433 = vshrl.u32 %v1408, 16
        %v1434 = vpack.i.b16 %v1433, %v1432
        %v1437 = vpack.i.b16 %v1416, %v1412
        %v1438 = vshrl.u32 %v1412, 16
        %v1439 = vshrl.u32 %v1416, 16
        %v1440 = vpack.i.b16 %v1439, %v1438
        %v1443 = vunpack.c.l.s4 1983009808
        %v1444 = vunpack.c.0.s8 %v1443
        %v1445 = vlaneseq
        %v1446 = vshrl.u32 %v1445, 7
        %v1447 = vsub.s32 %v1444, %v1446
        %v1448 = vrot.slane %v1419, %v1447
        %v1451 = vunpack.c.l.s4 1983009808
        %v1452 = vunpack.c.0.s8 %v1451
        %v1453 = vlaneseq
        %v1454 = vshrl.u32 %v1453, 7
        %v1455 = vsub.s32 %v1452, %v1454
        %v1456 = vrot.slane %v1425, %v1455
        %v1457 = vcombine.low %v1448, %v1456
        %v1458 = vcombine.high %v1448, %v1456
        %v1460 = vunpack.c.l.s4 1934713408
        %v1461 = vunpack.c.0.s8 %v1460
        %v1462 = vlaneseq
        %v1463 = vshrl.u32 %v1462, 7
        %v1464 = vsub.s32 %v1461, %v1463
        %v1465 = vrot.slane %v1457, %v1464
        %v1467 = vunpack.c.l.s4 1934713408
        %v1468 = vunpack.c.0.s8 %v1467
        %v1469 = vlaneseq
        %v1470 = vshrl.u32 %v1469, 7
        %v1471 = vsub.s32 %v1468, %v1470
        %v1472 = vrot.slane %v1458, %v1471
        %v1473 = vcombine.high %v1465, 0
        %v1474 = vcombine.high %v1472, 0
        %v1477 = vunpack.c.l.s4 1983009808
        %v1478 = vunpack.c.0.s8 %v1477
        %v1479 = vlaneseq
        %v1480 = vshrl.u32 %v1479, 7
        %v1481 = vsub.s32 %v1478, %v1480
        %v1482 = vrot.slane %v1422, %v1481
        %v1485 = vunpack.c.l.s4 1983009808
        %v1486 = vunpack.c.0.s8 %v1485
        %v1487 = vlaneseq
        %v1488 = vshrl.u32 %v1487, 7
        %v1489 = vsub.s32 %v1486, %v1488
        %v1490 = vrot.slane %v1428, %v1489
        %v1491 = vcombine.low %v1482, %v1490
        %v1492 = vcombine.high %v1482, %v1490
        %v1494 = vunpack.c.l.s4 1934713408
        %v1495 = vunpack.c.0.s8 %v1494
        %v1496 = vlaneseq
        %v1497 = vshrl.u32 %v1496, 7
        %v1498 = vsub.s32 %v1495, %v1497
        %v1499 = vrot.slane %v1491, %v1498
        %v1501 = vunpack.c.l.s4 1934713408
        %v1502 = vunpack.c.0.s8 %v1501
        %v1503 = vlaneseq
        %v1504 = vshrl.u32 %v1503, 7
        %v1505 = vsub.s32 %v1502, %v1504
        %v1506 = vrot.slane %v1492, %v1505
        %v1507 = vcombine.high %v1499, 0
        %v1508 = vcombine.high %v1506, 0
        %v1511 = vunpack.c.l.s4 1983009808
        %v1512 = vunpack.c.0.s8 %v1511
        %v1513 = vlaneseq
        %v1514 = vshrl.u32 %v1513, 7
        %v1515 = vsub.s32 %v1512, %v1514
        %v1516 = vrot.slane %v1431, %v1515
        %v1519 = vunpack.c.l.s4 1983009808
        %v1520 = vunpack.c.0.s8 %v1519
        %v1521 = vlaneseq
        %v1522 = vshrl.u32 %v1521, 7
        %v1523 = vsub.s32 %v1520, %v1522
        %v1524 = vrot.slane %v1437, %v1523
        %v1525 = vcombine.low %v1516, %v1524
        %v1526 = vcombine.high %v1516, %v1524
        %v1528 = vunpack.c.l.s4 1934713408
        %v1529 = vunpack.c.0.s8 %v1528
        %v1530 = vlaneseq
        %v1531 = vshrl.u32 %v1530, 7
        %v1532 = vsub.s32 %v1529, %v1531
        %v1533 = vrot.slane %v1525, %v1532
        %v1535 = vunpack.c.l.s4 1934713408
        %v1536 = vunpack.c.0.s8 %v1535
        %v1537 = vlaneseq
        %v1538 = vshrl.u32 %v1537, 7
        %v1539 = vsub.s32 %v1536, %v1538
        %v1540 = vrot.slane %v1526, %v1539
        %v1541 = vcombine.high %v1533, 0
        %v1542 = vcombine.high %v1540, 0
        %v1545 = vunpack.c.l.s4 1983009808
        %v1546 = vunpack.c.0.s8 %v1545
        %v1547 = vlaneseq
        %v1548 = vshrl.u32 %v1547, 7
        %v1549 = vsub.s32 %v1546, %v1548
        %v1550 = vrot.slane %v1434, %v1549
        %v1553 = vunpack.c.l.s4 1983009808
        %v1554 = vunpack.c.0.s8 %v1553
        %v1555 = vlaneseq
        %v1556 = vshrl.u32 %v1555, 7
        %v1557 = vsub.s32 %v1554, %v1556
        %v1558 = vrot.slane %v1440, %v1557
        %v1559 = vcombine.low %v1550, %v1558
        %v1560 = vcombine.high %v1550, %v1558
        %v1562 = vunpack.c.l.s4 1934713408
        %v1563 = vunpack.c.0.s8 %v1562
        %v1564 = vlaneseq
        %v1565 = vshrl.u32 %v1564, 7
        %v1566 = vsub.s32 %v1563, %v1565
        %v1567 = vrot.slane %v1559, %v1566
        %v1569 = vunpack.c.l.s4 1934713408
        %v1570 = vunpack.c.0.s8 %v1569
        %v1571 = vlaneseq
        %v1572 = vshrl.u32 %v1571, 7
        %v1573 = vsub.s32 %v1570, %v1572
        %v1574 = vrot.slane %v1560, %v1573
        %v1575 = vcombine.high %v1567, 0
        %v1576 = vcombine.high %v1574, 0
        %v1578 = vunpack.c.l.b16 %v1499
        %v1579 = vpack.c.b16 %v1578, %v1578
        %1580 = vrot.lane.b32.xlu0 %v1579, 16
        %v1581 = vpop.permute.xlu0 %1580
        %v1583 = vunpack.c.l.b16 %v1473
        %v1584 = vpack.c.b16 %v1583, %v1583
        %1585 = vrot.lane.b32.xlu0 %v1584, 32
        %v1586 = vpop.permute.xlu0 %1585
        %v1588 = vunpack.c.l.b16 %v1507
        %v1589 = vpack.c.b16 %v1588, %v1588
        %1590 = vrot.lane.b32.xlu0 %v1589, 48
        %v1591 = vpop.permute.xlu0 %1590
        %v1593 = vunpack.c.l.b16 %v1472
        %v1594 = vpack.c.b16 %v1593, %v1593
        %1595 = vrot.lane.b32.xlu0 %v1594, 64
        %v1596 = vpop.permute.xlu0 %1595
        %v1598 = vunpack.c.l.b16 %v1506
        %v1599 = vpack.c.b16 %v1598, %v1598
        %1600 = vrot.lane.b32.xlu0 %v1599, 80
        %v1601 = vpop.permute.xlu0 %1600
        %v1603 = vunpack.c.l.b16 %v1474
        %v1604 = vpack.c.b16 %v1603, %v1603
        %1605 = vrot.lane.b32.xlu0 %v1604, 96
        %v1606 = vpop.permute.xlu0 %1605
        %v1608 = vunpack.c.l.b16 %v1508
        %v1609 = vpack.c.b16 %v1608, %v1608
        %1610 = vrot.lane.b32.xlu0 %v1609, 112
        %v1611 = vpop.permute.xlu0 %1610
        %v1613 = vunpack.c.l.b16 %v1567
        %v1614 = vpack.c.b16 %v1613, %v1613
        %1615 = vrot.lane.b32.xlu0 %v1614, 16
        %v1616 = vpop.permute.xlu0 %1615
        %v1618 = vunpack.c.l.b16 %v1541
        %v1619 = vpack.c.b16 %v1618, %v1618
        %1620 = vrot.lane.b32.xlu0 %v1619, 32
        %v1621 = vpop.permute.xlu0 %1620
        %v1623 = vunpack.c.l.b16 %v1575
        %v1624 = vpack.c.b16 %v1623, %v1623
        %1625 = vrot.lane.b32.xlu0 %v1624, 48
        %v1626 = vpop.permute.xlu0 %1625
        %v1628 = vunpack.c.l.b16 %v1540
        %v1629 = vpack.c.b16 %v1628, %v1628
        %1630 = vrot.lane.b32.xlu0 %v1629, 64
        %v1631 = vpop.permute.xlu0 %1630
        %v1633 = vunpack.c.l.b16 %v1574
        %v1634 = vpack.c.b16 %v1633, %v1633
        %1635 = vrot.lane.b32.xlu0 %v1634, 80
        %v1636 = vpop.permute.xlu0 %1635
        %v1638 = vunpack.c.l.b16 %v1542
        %v1639 = vpack.c.b16 %v1638, %v1638
        %1640 = vrot.lane.b32.xlu0 %v1639, 96
        %v1641 = vpop.permute.xlu0 %1640
        %v1643 = vunpack.c.l.b16 %v1576
        %v1644 = vpack.c.b16 %v1643, %v1643
        %1645 = vrot.lane.b32.xlu0 %v1644, 112
        %v1646 = vpop.permute.xlu0 %1645
        %v1649 = vsel %vm461, %v1465, %v1581
        %v1651 = vsel %vm465, %v1649, %v1586
        %v1653 = vsel %vm468, %v1651, %v1591
        %v1655 = vsel %vm471, %v1653, %v1596
        %v1657 = vsel %vm474, %v1655, %v1601
        %v1659 = vsel %vm477, %v1657, %v1606
        %v1661 = vsel %vm480, %v1659, %v1611
        %v1664 = vsel %vm461, %v1533, %v1616
        %v1666 = vsel %vm465, %v1664, %v1621
        %v1668 = vsel %vm468, %v1666, %v1626
        %v1670 = vsel %vm471, %v1668, %v1631
        %v1672 = vsel %vm474, %v1670, %v1636
        %v1674 = vsel %vm477, %v1672, %v1641
        %v1676 = vsel %vm480, %v1674, %v1646
        %1677 = vrot.lane.b32.xlu0 %v1071, 126
        %v1678 = vpop.permute.xlu0 %1677
        %1679 = vrot.lane.b32.xlu0 %v1080, 126
        %v1680 = vpop.permute.xlu0 %1679
        %1681 = vrot.lane.b32.xlu0 %v1091, 126
        %v1682 = vpop.permute.xlu0 %1681
        %1683 = vrot.lane.b32.xlu0 %v1100, 126
        %v1684 = vpop.permute.xlu0 %1683
        %1685 = vrot.lane.b32.xlu0 %v1111, 126
        %v1686 = vpop.permute.xlu0 %1685
        %1687 = vrot.lane.b32.xlu0 %v1120, 126
        %v1688 = vpop.permute.xlu0 %1687
        %1689 = vrot.lane.b32.xlu0 %v1131, 126
        %v1690 = vpop.permute.xlu0 %1689
        %1691 = vrot.lane.b32.xlu0 %v1140, 126
        %v1692 = vpop.permute.xlu0 %1691
        %v1695 = vpack.i.b16 %v1682, %v1678
        %v1696 = vshrl.u32 %v1678, 16
        %v1697 = vshrl.u32 %v1682, 16
        %v1698 = vpack.i.b16 %v1697, %v1696
        %v1701 = vpack.i.b16 %v1690, %v1686
        %v1702 = vshrl.u32 %v1686, 16
        %v1703 = vshrl.u32 %v1690, 16
        %v1704 = vpack.i.b16 %v1703, %v1702
        %v1707 = vpack.i.b16 %v1684, %v1680
        %v1708 = vshrl.u32 %v1680, 16
        %v1709 = vshrl.u32 %v1684, 16
        %v1710 = vpack.i.b16 %v1709, %v1708
        %v1713 = vpack.i.b16 %v1692, %v1688
        %v1714 = vshrl.u32 %v1688, 16
        %v1715 = vshrl.u32 %v1692, 16
        %v1716 = vpack.i.b16 %v1715, %v1714
        %v1719 = vunpack.c.l.s4 1983009808
        %v1720 = vunpack.c.0.s8 %v1719
        %v1721 = vlaneseq
        %v1722 = vshrl.u32 %v1721, 7
        %v1723 = vsub.s32 %v1720, %v1722
        %v1724 = vrot.slane %v1695, %v1723
        %v1727 = vunpack.c.l.s4 1983009808
        %v1728 = vunpack.c.0.s8 %v1727
        %v1729 = vlaneseq
        %v1730 = vshrl.u32 %v1729, 7
        %v1731 = vsub.s32 %v1728, %v1730
        %v1732 = vrot.slane %v1701, %v1731
        %v1733 = vcombine.low %v1724, %v1732
        %v1734 = vcombine.high %v1724, %v1732
        %v1736 = vunpack.c.l.s4 1934713408
        %v1737 = vunpack.c.0.s8 %v1736
        %v1738 = vlaneseq
        %v1739 = vshrl.u32 %v1738, 7
        %v1740 = vsub.s32 %v1737, %v1739
        %v1741 = vrot.slane %v1733, %v1740
        %v1743 = vunpack.c.l.s4 1934713408
        %v1744 = vunpack.c.0.s8 %v1743
        %v1745 = vlaneseq
        %v1746 = vshrl.u32 %v1745, 7
        %v1747 = vsub.s32 %v1744, %v1746
        %v1748 = vrot.slane %v1734, %v1747
        %v1749 = vcombine.high %v1741, 0
        %v1750 = vcombine.high %v1748, 0
        %v1753 = vunpack.c.l.s4 1983009808
        %v1754 = vunpack.c.0.s8 %v1753
        %v1755 = vlaneseq
        %v1756 = vshrl.u32 %v1755, 7
        %v1757 = vsub.s32 %v1754, %v1756
        %v1758 = vrot.slane %v1698, %v1757
        %v1761 = vunpack.c.l.s4 1983009808
        %v1762 = vunpack.c.0.s8 %v1761
        %v1763 = vlaneseq
        %v1764 = vshrl.u32 %v1763, 7
        %v1765 = vsub.s32 %v1762, %v1764
        %v1766 = vrot.slane %v1704, %v1765
        %v1767 = vcombine.low %v1758, %v1766
        %v1768 = vcombine.high %v1758, %v1766
        %v1770 = vunpack.c.l.s4 1934713408
        %v1771 = vunpack.c.0.s8 %v1770
        %v1772 = vlaneseq
        %v1773 = vshrl.u32 %v1772, 7
        %v1774 = vsub.s32 %v1771, %v1773
        %v1775 = vrot.slane %v1767, %v1774
        %v1777 = vunpack.c.l.s4 1934713408
        %v1778 = vunpack.c.0.s8 %v1777
        %v1779 = vlaneseq
        %v1780 = vshrl.u32 %v1779, 7
        %v1781 = vsub.s32 %v1778, %v1780
        %v1782 = vrot.slane %v1768, %v1781
        %v1783 = vcombine.high %v1775, 0
        %v1784 = vcombine.high %v1782, 0
        %v1787 = vunpack.c.l.s4 1983009808
        %v1788 = vunpack.c.0.s8 %v1787
        %v1789 = vlaneseq
        %v1790 = vshrl.u32 %v1789, 7
        %v1791 = vsub.s32 %v1788, %v1790
        %v1792 = vrot.slane %v1707, %v1791
        %v1795 = vunpack.c.l.s4 1983009808
        %v1796 = vunpack.c.0.s8 %v1795
        %v1797 = vlaneseq
        %v1798 = vshrl.u32 %v1797, 7
        %v1799 = vsub.s32 %v1796, %v1798
        %v1800 = vrot.slane %v1713, %v1799
        %v1801 = vcombine.low %v1792, %v1800
        %v1802 = vcombine.high %v1792, %v1800
        %v1804 = vunpack.c.l.s4 1934713408
        %v1805 = vunpack.c.0.s8 %v1804
        %v1806 = vlaneseq
        %v1807 = vshrl.u32 %v1806, 7
        %v1808 = vsub.s32 %v1805, %v1807
        %v1809 = vrot.slane %v1801, %v1808
        %v1811 = vunpack.c.l.s4 1934713408
        %v1812 = vunpack.c.0.s8 %v1811
        %v1813 = vlaneseq
        %v1814 = vshrl.u32 %v1813, 7
        %v1815 = vsub.s32 %v1812, %v1814
        %v1816 = vrot.slane %v1802, %v1815
        %v1817 = vcombine.high %v1809, 0
        %v1818 = vcombine.high %v1816, 0
        %v1821 = vunpack.c.l.s4 1983009808
        %v1822 = vunpack.c.0.s8 %v1821
        %v1823 = vlaneseq
        %v1824 = vshrl.u32 %v1823, 7
        %v1825 = vsub.s32 %v1822, %v1824
        %v1826 = vrot.slane %v1710, %v1825
        %v1829 = vunpack.c.l.s4 1983009808
        %v1830 = vunpack.c.0.s8 %v1829
        %v1831 = vlaneseq
        %v1832 = vshrl.u32 %v1831, 7
        %v1833 = vsub.s32 %v1830, %v1832
        %v1834 = vrot.slane %v1716, %v1833
        %v1835 = vcombine.low %v1826, %v1834
        %v1836 = vcombine.high %v1826, %v1834
        %v1838 = vunpack.c.l.s4 1934713408
        %v1839 = vunpack.c.0.s8 %v1838
        %v1840 = vlaneseq
        %v1841 = vshrl.u32 %v1840, 7
        %v1842 = vsub.s32 %v1839, %v1841
        %v1843 = vrot.slane %v1835, %v1842
        %v1845 = vunpack.c.l.s4 1934713408
        %v1846 = vunpack.c.0.s8 %v1845
        %v1847 = vlaneseq
        %v1848 = vshrl.u32 %v1847, 7
        %v1849 = vsub.s32 %v1846, %v1848
        %v1850 = vrot.slane %v1836, %v1849
        %v1851 = vcombine.high %v1843, 0
        %v1852 = vcombine.high %v1850, 0
        %v1854 = vunpack.c.l.b16 %v1775
        %v1855 = vpack.c.b16 %v1854, %v1854
        %1856 = vrot.lane.b32.xlu0 %v1855, 16
        %v1857 = vpop.permute.xlu0 %1856
        %v1859 = vunpack.c.l.b16 %v1749
        %v1860 = vpack.c.b16 %v1859, %v1859
        %1861 = vrot.lane.b32.xlu0 %v1860, 32
        %v1862 = vpop.permute.xlu0 %1861
        %v1864 = vunpack.c.l.b16 %v1783
        %v1865 = vpack.c.b16 %v1864, %v1864
        %1866 = vrot.lane.b32.xlu0 %v1865, 48
        %v1867 = vpop.permute.xlu0 %1866
        %v1869 = vunpack.c.l.b16 %v1748
        %v1870 = vpack.c.b16 %v1869, %v1869
        %1871 = vrot.lane.b32.xlu0 %v1870, 64
        %v1872 = vpop.permute.xlu0 %1871
        %v1874 = vunpack.c.l.b16 %v1782
        %v1875 = vpack.c.b16 %v1874, %v1874
        %1876 = vrot.lane.b32.xlu0 %v1875, 80
        %v1877 = vpop.permute.xlu0 %1876
        %v1879 = vunpack.c.l.b16 %v1750
        %v1880 = vpack.c.b16 %v1879, %v1879
        %1881 = vrot.lane.b32.xlu0 %v1880, 96
        %v1882 = vpop.permute.xlu0 %1881
        %v1884 = vunpack.c.l.b16 %v1784
        %v1885 = vpack.c.b16 %v1884, %v1884
        %1886 = vrot.lane.b32.xlu0 %v1885, 112
        %v1887 = vpop.permute.xlu0 %1886
        %v1889 = vunpack.c.l.b16 %v1843
        %v1890 = vpack.c.b16 %v1889, %v1889
        %1891 = vrot.lane.b32.xlu0 %v1890, 16
        %v1892 = vpop.permute.xlu0 %1891
        %v1894 = vunpack.c.l.b16 %v1817
        %v1895 = vpack.c.b16 %v1894, %v1894
        %1896 = vrot.lane.b32.xlu0 %v1895, 32
        %v1897 = vpop.permute.xlu0 %1896
        %v1899 = vunpack.c.l.b16 %v1851
        %v1900 = vpack.c.b16 %v1899, %v1899
        %1901 = vrot.lane.b32.xlu0 %v1900, 48
        %v1902 = vpop.permute.xlu0 %1901
        %v1904 = vunpack.c.l.b16 %v1816
        %v1905 = vpack.c.b16 %v1904, %v1904
        %1906 = vrot.lane.b32.xlu0 %v1905, 64
        %v1907 = vpop.permute.xlu0 %1906
        %v1909 = vunpack.c.l.b16 %v1850
        %v1910 = vpack.c.b16 %v1909, %v1909
        %1911 = vrot.lane.b32.xlu0 %v1910, 80
        %v1912 = vpop.permute.xlu0 %1911
        %v1914 = vunpack.c.l.b16 %v1818
        %v1915 = vpack.c.b16 %v1914, %v1914
        %1916 = vrot.lane.b32.xlu0 %v1915, 96
        %v1917 = vpop.permute.xlu0 %1916
        %v1919 = vunpack.c.l.b16 %v1852
        %v1920 = vpack.c.b16 %v1919, %v1919
        %1921 = vrot.lane.b32.xlu0 %v1920, 112
        %v1922 = vpop.permute.xlu0 %1921
        %v1925 = vsel %vm461, %v1741, %v1857
        %v1927 = vsel %vm465, %v1925, %v1862
        %v1929 = vsel %vm468, %v1927, %v1867
        %v1931 = vsel %vm471, %v1929, %v1872
        %v1933 = vsel %vm474, %v1931, %v1877
        %v1935 = vsel %vm477, %v1933, %v1882
        %v1937 = vsel %vm480, %v1935, %v1887
        %v1940 = vsel %vm461, %v1809, %v1892
        %v1942 = vsel %vm465, %v1940, %v1897
        %v1944 = vsel %vm468, %v1942, %v1902
        %v1946 = vsel %vm471, %v1944, %v1907
        %v1948 = vsel %vm474, %v1946, %v1912
        %v1950 = vsel %vm477, %v1948, %v1917
        %v1952 = vsel %vm480, %v1950, %v1922
        %vm1957 = vcmask 1042432
        %vm1958 = vcmask 1046532
        %vm1959 = vmor %vm1957, %vm1958
        %v1960 = vrot.slane %v219, 5
        %v1961 = vrot.slane %v1960, 4
        %v1962 = vrot.slane %v220, 5
        %v1963 = vsel %vm1959, %v1961, %v1962
        %v1964 = vrot.slane %v1962, 4
        %v1965 = vrot.slane %v221, 5
        %v1966 = vsel %vm1959, %v1964, %v1965
        %v1967 = vrot.slane %v222, 5
        %v1968 = vrot.slane %v1967, 4
        %v1969 = vrot.slane %v223, 5
        %v1970 = vsel %vm1959, %v1968, %v1969
        %v1971 = vrot.slane %v1969, 4
        %v1972 = vrot.slane %v224, 5
        %v1973 = vsel %vm1959, %v1971, %v1972
        %v1974 = vrot.slane %v225, 5
        %v1975 = vrot.slane %v1974, 4
        %v1976 = vrot.slane %v226, 5
        %v1977 = vsel %vm1959, %v1975, %v1976
        %v1978 = vrot.slane %v1976, 4
        %v1979 = vrot.slane %v227, 5
        %v1980 = vsel %vm1959, %v1978, %v1979
        %v1981 = vrot.slane %v228, 5
        %v1982 = vrot.slane %v1981, 4
        %v1983 = vrot.slane %v229, 5
        %v1984 = vsel %vm1959, %v1982, %v1983
        %v1985 = vrot.slane %v1983, 4
        %v1986 = vrot.slane %v230, 5
        %v1987 = vsel %vm1959, %v1985, %v1986
        %v1990 = vpack.i.b16 %v1970, %v1963
        %v1991 = vshrl.u32 %v1963, 16
        %v1992 = vshrl.u32 %v1970, 16
        %v1993 = vpack.i.b16 %v1992, %v1991
        %v1996 = vpack.i.b16 %v1984, %v1977
        %v1997 = vshrl.u32 %v1977, 16
        %v1998 = vshrl.u32 %v1984, 16
        %v1999 = vpack.i.b16 %v1998, %v1997
        %v2002 = vpack.i.b16 %v1973, %v1966
        %v2003 = vshrl.u32 %v1966, 16
        %v2004 = vshrl.u32 %v1973, 16
        %v2005 = vpack.i.b16 %v2004, %v2003
        %v2008 = vpack.i.b16 %v1987, %v1980
        %v2009 = vshrl.u32 %v1980, 16
        %v2010 = vshrl.u32 %v1987, 16
        %v2011 = vpack.i.b16 %v2010, %v2009
        %v2014 = vunpack.c.l.s4 1983009808
        %v2015 = vunpack.c.0.s8 %v2014
        %v2016 = vlaneseq
        %v2017 = vshrl.u32 %v2016, 7
        %v2018 = vsub.s32 %v2015, %v2017
        %v2019 = vrot.slane %v1990, %v2018
        %v2022 = vunpack.c.l.s4 1983009808
        %v2023 = vunpack.c.0.s8 %v2022
        %v2024 = vlaneseq
        %v2025 = vshrl.u32 %v2024, 7
        %v2026 = vsub.s32 %v2023, %v2025
        %v2027 = vrot.slane %v1996, %v2026
        %v2028 = vcombine.low %v2019, %v2027
        %v2029 = vcombine.high %v2019, %v2027
        %v2031 = vunpack.c.l.s4 1934713408
        %v2032 = vunpack.c.0.s8 %v2031
        %v2033 = vlaneseq
        %v2034 = vshrl.u32 %v2033, 7
        %v2035 = vsub.s32 %v2032, %v2034
        %v2036 = vrot.slane %v2028, %v2035
        %v2038 = vunpack.c.l.s4 1934713408
        %v2039 = vunpack.c.0.s8 %v2038
        %v2040 = vlaneseq
        %v2041 = vshrl.u32 %v2040, 7
        %v2042 = vsub.s32 %v2039, %v2041
        %v2043 = vrot.slane %v2029, %v2042
        %v2044 = vcombine.high %v2036, 0
        %v2045 = vcombine.high %v2043, 0
        %v2048 = vunpack.c.l.s4 1983009808
        %v2049 = vunpack.c.0.s8 %v2048
        %v2050 = vlaneseq
        %v2051 = vshrl.u32 %v2050, 7
        %v2052 = vsub.s32 %v2049, %v2051
        %v2053 = vrot.slane %v1993, %v2052
        %v2056 = vunpack.c.l.s4 1983009808
        %v2057 = vunpack.c.0.s8 %v2056
        %v2058 = vlaneseq
        %v2059 = vshrl.u32 %v2058, 7
        %v2060 = vsub.s32 %v2057, %v2059
        %v2061 = vrot.slane %v1999, %v2060
        %v2062 = vcombine.low %v2053, %v2061
        %v2063 = vcombine.high %v2053, %v2061
        %v2065 = vunpack.c.l.s4 1934713408
        %v2066 = vunpack.c.0.s8 %v2065
        %v2067 = vlaneseq
        %v2068 = vshrl.u32 %v2067, 7
        %v2069 = vsub.s32 %v2066, %v2068
        %v2070 = vrot.slane %v2062, %v2069
        %v2072 = vunpack.c.l.s4 1934713408
        %v2073 = vunpack.c.0.s8 %v2072
        %v2074 = vlaneseq
        %v2075 = vshrl.u32 %v2074, 7
        %v2076 = vsub.s32 %v2073, %v2075
        %v2077 = vrot.slane %v2063, %v2076
        %v2078 = vcombine.high %v2070, 0
        %v2079 = vcombine.high %v2077, 0
        %v2082 = vunpack.c.l.s4 1983009808
        %v2083 = vunpack.c.0.s8 %v2082
        %v2084 = vlaneseq
        %v2085 = vshrl.u32 %v2084, 7
        %v2086 = vsub.s32 %v2083, %v2085
        %v2087 = vrot.slane %v2002, %v2086
        %v2090 = vunpack.c.l.s4 1983009808
        %v2091 = vunpack.c.0.s8 %v2090
        %v2092 = vlaneseq
        %v2093 = vshrl.u32 %v2092, 7
        %v2094 = vsub.s32 %v2091, %v2093
        %v2095 = vrot.slane %v2008, %v2094
        %v2096 = vcombine.low %v2087, %v2095
        %v2097 = vcombine.high %v2087, %v2095
        %v2099 = vunpack.c.l.s4 1934713408
        %v2100 = vunpack.c.0.s8 %v2099
        %v2101 = vlaneseq
        %v2102 = vshrl.u32 %v2101, 7
        %v2103 = vsub.s32 %v2100, %v2102
        %v2104 = vrot.slane %v2096, %v2103
        %v2106 = vunpack.c.l.s4 1934713408
        %v2107 = vunpack.c.0.s8 %v2106
        %v2108 = vlaneseq
        %v2109 = vshrl.u32 %v2108, 7
        %v2110 = vsub.s32 %v2107, %v2109
        %v2111 = vrot.slane %v2097, %v2110
        %v2112 = vcombine.high %v2104, 0
        %v2113 = vcombine.high %v2111, 0
        %v2116 = vunpack.c.l.s4 1983009808
        %v2117 = vunpack.c.0.s8 %v2116
        %v2118 = vlaneseq
        %v2119 = vshrl.u32 %v2118, 7
        %v2120 = vsub.s32 %v2117, %v2119
        %v2121 = vrot.slane %v2005, %v2120
        %v2124 = vunpack.c.l.s4 1983009808
        %v2125 = vunpack.c.0.s8 %v2124
        %v2126 = vlaneseq
        %v2127 = vshrl.u32 %v2126, 7
        %v2128 = vsub.s32 %v2125, %v2127
        %v2129 = vrot.slane %v2011, %v2128
        %v2130 = vcombine.low %v2121, %v2129
        %v2131 = vcombine.high %v2121, %v2129
        %v2133 = vunpack.c.l.s4 1934713408
        %v2134 = vunpack.c.0.s8 %v2133
        %v2135 = vlaneseq
        %v2136 = vshrl.u32 %v2135, 7
        %v2137 = vsub.s32 %v2134, %v2136
        %v2138 = vrot.slane %v2130, %v2137
        %v2140 = vunpack.c.l.s4 1934713408
        %v2141 = vunpack.c.0.s8 %v2140
        %v2142 = vlaneseq
        %v2143 = vshrl.u32 %v2142, 7
        %v2144 = vsub.s32 %v2141, %v2143
        %v2145 = vrot.slane %v2131, %v2144
        %v2146 = vcombine.high %v2138, 0
        %v2147 = vcombine.high %v2145, 0
        %v2149 = vunpack.c.l.b16 %v2070
        %v2150 = vpack.c.b16 %v2149, %v2149
        %2151 = vrot.lane.b32.xlu0 %v2150, 16
        %v2152 = vpop.permute.xlu0 %2151
        %v2154 = vunpack.c.l.b16 %v2044
        %v2155 = vpack.c.b16 %v2154, %v2154
        %2156 = vrot.lane.b32.xlu0 %v2155, 32
        %v2157 = vpop.permute.xlu0 %2156
        %v2159 = vunpack.c.l.b16 %v2078
        %v2160 = vpack.c.b16 %v2159, %v2159
        %2161 = vrot.lane.b32.xlu0 %v2160, 48
        %v2162 = vpop.permute.xlu0 %2161
        %v2164 = vunpack.c.l.b16 %v2043
        %v2165 = vpack.c.b16 %v2164, %v2164
        %2166 = vrot.lane.b32.xlu0 %v2165, 64
        %v2167 = vpop.permute.xlu0 %2166
        %v2169 = vunpack.c.l.b16 %v2077
        %v2170 = vpack.c.b16 %v2169, %v2169
        %2171 = vrot.lane.b32.xlu0 %v2170, 80
        %v2172 = vpop.permute.xlu0 %2171
        %v2174 = vunpack.c.l.b16 %v2045
        %v2175 = vpack.c.b16 %v2174, %v2174
        %2176 = vrot.lane.b32.xlu0 %v2175, 96
        %v2177 = vpop.permute.xlu0 %2176
        %v2179 = vunpack.c.l.b16 %v2079
        %v2180 = vpack.c.b16 %v2179, %v2179
        %2181 = vrot.lane.b32.xlu0 %v2180, 112
        %v2182 = vpop.permute.xlu0 %2181
        %v2184 = vunpack.c.l.b16 %v2138
        %v2185 = vpack.c.b16 %v2184, %v2184
        %2186 = vrot.lane.b32.xlu0 %v2185, 16
        %v2187 = vpop.permute.xlu0 %2186
        %v2189 = vunpack.c.l.b16 %v2112
        %v2190 = vpack.c.b16 %v2189, %v2189
        %2191 = vrot.lane.b32.xlu0 %v2190, 32
        %v2192 = vpop.permute.xlu0 %2191
        %v2194 = vunpack.c.l.b16 %v2146
        %v2195 = vpack.c.b16 %v2194, %v2194
        %2196 = vrot.lane.b32.xlu0 %v2195, 48
        %v2197 = vpop.permute.xlu0 %2196
        %v2199 = vunpack.c.l.b16 %v2111
        %v2200 = vpack.c.b16 %v2199, %v2199
        %2201 = vrot.lane.b32.xlu0 %v2200, 64
        %v2202 = vpop.permute.xlu0 %2201
        %v2204 = vunpack.c.l.b16 %v2145
        %v2205 = vpack.c.b16 %v2204, %v2204
        %2206 = vrot.lane.b32.xlu0 %v2205, 80
        %v2207 = vpop.permute.xlu0 %2206
        %v2209 = vunpack.c.l.b16 %v2113
        %v2210 = vpack.c.b16 %v2209, %v2209
        %2211 = vrot.lane.b32.xlu0 %v2210, 96
        %v2212 = vpop.permute.xlu0 %2211
        %v2214 = vunpack.c.l.b16 %v2147
        %v2215 = vpack.c.b16 %v2214, %v2214
        %2216 = vrot.lane.b32.xlu0 %v2215, 112
        %v2217 = vpop.permute.xlu0 %2216
        %v2220 = vsel %vm461, %v2036, %v2152
        %v2222 = vsel %vm465, %v2220, %v2157
        %v2224 = vsel %vm468, %v2222, %v2162
        %v2226 = vsel %vm471, %v2224, %v2167
        %v2228 = vsel %vm474, %v2226, %v2172
        %v2230 = vsel %vm477, %v2228, %v2177
        %v2232 = vsel %vm480, %v2230, %v2182
        %v2235 = vsel %vm461, %v2104, %v2187
        %v2237 = vsel %vm465, %v2235, %v2192
        %v2239 = vsel %vm468, %v2237, %v2197
        %v2241 = vsel %vm471, %v2239, %v2202
        %v2243 = vsel %vm474, %v2241, %v2207
        %v2245 = vsel %vm477, %v2243, %v2212
        %v2247 = vsel %vm480, %v2245, %v2217
        %2248 = vrot.lane.b32.xlu0 %v1963, 127
        %v2249 = vpop.permute.xlu0 %2248
        %2250 = vrot.lane.b32.xlu0 %v1966, 127
        %v2251 = vpop.permute.xlu0 %2250
        %2252 = vrot.lane.b32.xlu0 %v1970, 127
        %v2253 = vpop.permute.xlu0 %2252
        %2254 = vrot.lane.b32.xlu0 %v1973, 127
        %v2255 = vpop.permute.xlu0 %2254
        %2256 = vrot.lane.b32.xlu0 %v1977, 127
        %v2257 = vpop.permute.xlu0 %2256
        %2258 = vrot.lane.b32.xlu0 %v1980, 127
        %v2259 = vpop.permute.xlu0 %2258
        %2260 = vrot.lane.b32.xlu0 %v1984, 127
        %v2261 = vpop.permute.xlu0 %2260
        %2262 = vrot.lane.b32.xlu0 %v1987, 127
        %v2263 = vpop.permute.xlu0 %2262
        %v2266 = vpack.i.b16 %v2253, %v2249
        %v2267 = vshrl.u32 %v2249, 16
        %v2268 = vshrl.u32 %v2253, 16
        %v2269 = vpack.i.b16 %v2268, %v2267
        %v2272 = vpack.i.b16 %v2261, %v2257
        %v2273 = vshrl.u32 %v2257, 16
        %v2274 = vshrl.u32 %v2261, 16
        %v2275 = vpack.i.b16 %v2274, %v2273
        %v2278 = vpack.i.b16 %v2255, %v2251
        %v2279 = vshrl.u32 %v2251, 16
        %v2280 = vshrl.u32 %v2255, 16
        %v2281 = vpack.i.b16 %v2280, %v2279
        %v2284 = vpack.i.b16 %v2263, %v2259
        %v2285 = vshrl.u32 %v2259, 16
        %v2286 = vshrl.u32 %v2263, 16
        %v2287 = vpack.i.b16 %v2286, %v2285
        %v2290 = vunpack.c.l.s4 1983009808
        %v2291 = vunpack.c.0.s8 %v2290
        %v2292 = vlaneseq
        %v2293 = vshrl.u32 %v2292, 7
        %v2294 = vsub.s32 %v2291, %v2293
        %v2295 = vrot.slane %v2266, %v2294
        %v2298 = vunpack.c.l.s4 1983009808
        %v2299 = vunpack.c.0.s8 %v2298
        %v2300 = vlaneseq
        %v2301 = vshrl.u32 %v2300, 7
        %v2302 = vsub.s32 %v2299, %v2301
        %v2303 = vrot.slane %v2272, %v2302
        %v2304 = vcombine.low %v2295, %v2303
        %v2305 = vcombine.high %v2295, %v2303
        %v2307 = vunpack.c.l.s4 1934713408
        %v2308 = vunpack.c.0.s8 %v2307
        %v2309 = vlaneseq
        %v2310 = vshrl.u32 %v2309, 7
        %v2311 = vsub.s32 %v2308, %v2310
        %v2312 = vrot.slane %v2304, %v2311
        %v2314 = vunpack.c.l.s4 1934713408
        %v2315 = vunpack.c.0.s8 %v2314
        %v2316 = vlaneseq
        %v2317 = vshrl.u32 %v2316, 7
        %v2318 = vsub.s32 %v2315, %v2317
        %v2319 = vrot.slane %v2305, %v2318
        %v2320 = vcombine.high %v2312, 0
        %v2321 = vcombine.high %v2319, 0
        %v2324 = vunpack.c.l.s4 1983009808
        %v2325 = vunpack.c.0.s8 %v2324
        %v2326 = vlaneseq
        %v2327 = vshrl.u32 %v2326, 7
        %v2328 = vsub.s32 %v2325, %v2327
        %v2329 = vrot.slane %v2269, %v2328
        %v2332 = vunpack.c.l.s4 1983009808
        %v2333 = vunpack.c.0.s8 %v2332
        %v2334 = vlaneseq
        %v2335 = vshrl.u32 %v2334, 7
        %v2336 = vsub.s32 %v2333, %v2335
        %v2337 = vrot.slane %v2275, %v2336
        %v2338 = vcombine.low %v2329, %v2337
        %v2339 = vcombine.high %v2329, %v2337
        %v2341 = vunpack.c.l.s4 1934713408
        %v2342 = vunpack.c.0.s8 %v2341
        %v2343 = vlaneseq
        %v2344 = vshrl.u32 %v2343, 7
        %v2345 = vsub.s32 %v2342, %v2344
        %v2346 = vrot.slane %v2338, %v2345
        %v2348 = vunpack.c.l.s4 1934713408
        %v2349 = vunpack.c.0.s8 %v2348
        %v2350 = vlaneseq
        %v2351 = vshrl.u32 %v2350, 7
        %v2352 = vsub.s32 %v2349, %v2351
        %v2353 = vrot.slane %v2339, %v2352
        %v2354 = vcombine.high %v2346, 0
        %v2355 = vcombine.high %v2353, 0
        %v2358 = vunpack.c.l.s4 1983009808
        %v2359 = vunpack.c.0.s8 %v2358
        %v2360 = vlaneseq
        %v2361 = vshrl.u32 %v2360, 7
        %v2362 = vsub.s32 %v2359, %v2361
        %v2363 = vrot.slane %v2278, %v2362
        %v2366 = vunpack.c.l.s4 1983009808
        %v2367 = vunpack.c.0.s8 %v2366
        %v2368 = vlaneseq
        %v2369 = vshrl.u32 %v2368, 7
        %v2370 = vsub.s32 %v2367, %v2369
        %v2371 = vrot.slane %v2284, %v2370
        %v2372 = vcombine.low %v2363, %v2371
        %v2373 = vcombine.high %v2363, %v2371
        %v2375 = vunpack.c.l.s4 1934713408
        %v2376 = vunpack.c.0.s8 %v2375
        %v2377 = vlaneseq
        %v2378 = vshrl.u32 %v2377, 7
        %v2379 = vsub.s32 %v2376, %v2378
        %v2380 = vrot.slane %v2372, %v2379
        %v2382 = vunpack.c.l.s4 1934713408
        %v2383 = vunpack.c.0.s8 %v2382
        %v2384 = vlaneseq
        %v2385 = vshrl.u32 %v2384, 7
        %v2386 = vsub.s32 %v2383, %v2385
        %v2387 = vrot.slane %v2373, %v2386
        %v2388 = vcombine.high %v2380, 0
        %v2389 = vcombine.high %v2387, 0
        %v2392 = vunpack.c.l.s4 1983009808
        %v2393 = vunpack.c.0.s8 %v2392
        %v2394 = vlaneseq
        %v2395 = vshrl.u32 %v2394, 7
        %v2396 = vsub.s32 %v2393, %v2395
        %v2397 = vrot.slane %v2281, %v2396
        %v2400 = vunpack.c.l.s4 1983009808
        %v2401 = vunpack.c.0.s8 %v2400
        %v2402 = vlaneseq
        %v2403 = vshrl.u32 %v2402, 7
        %v2404 = vsub.s32 %v2401, %v2403
        %v2405 = vrot.slane %v2287, %v2404
        %v2406 = vcombine.low %v2397, %v2405
        %v2407 = vcombine.high %v2397, %v2405
        %v2409 = vunpack.c.l.s4 1934713408
        %v2410 = vunpack.c.0.s8 %v2409
        %v2411 = vlaneseq
        %v2412 = vshrl.u32 %v2411, 7
        %v2413 = vsub.s32 %v2410, %v2412
        %v2414 = vrot.slane %v2406, %v2413
        %v2416 = vunpack.c.l.s4 1934713408
        %v2417 = vunpack.c.0.s8 %v2416
        %v2418 = vlaneseq
        %v2419 = vshrl.u32 %v2418, 7
        %v2420 = vsub.s32 %v2417, %v2419
        %v2421 = vrot.slane %v2407, %v2420
        %v2422 = vcombine.high %v2414, 0
        %v2423 = vcombine.high %v2421, 0
        %v2425 = vunpack.c.l.b16 %v2346
        %v2426 = vpack.c.b16 %v2425, %v2425
        %2427 = vrot.lane.b32.xlu0 %v2426, 16
        %v2428 = vpop.permute.xlu0 %2427
        %v2430 = vunpack.c.l.b16 %v2320
        %v2431 = vpack.c.b16 %v2430, %v2430
        %2432 = vrot.lane.b32.xlu0 %v2431, 32
        %v2433 = vpop.permute.xlu0 %2432
        %v2435 = vunpack.c.l.b16 %v2354
        %v2436 = vpack.c.b16 %v2435, %v2435
        %2437 = vrot.lane.b32.xlu0 %v2436, 48
        %v2438 = vpop.permute.xlu0 %2437
        %v2440 = vunpack.c.l.b16 %v2319
        %v2441 = vpack.c.b16 %v2440, %v2440
        %2442 = vrot.lane.b32.xlu0 %v2441, 64
        %v2443 = vpop.permute.xlu0 %2442
        %v2445 = vunpack.c.l.b16 %v2353
        %v2446 = vpack.c.b16 %v2445, %v2445
        %2447 = vrot.lane.b32.xlu0 %v2446, 80
        %v2448 = vpop.permute.xlu0 %2447
        %v2450 = vunpack.c.l.b16 %v2321
        %v2451 = vpack.c.b16 %v2450, %v2450
        %2452 = vrot.lane.b32.xlu0 %v2451, 96
        %v2453 = vpop.permute.xlu0 %2452
        %v2455 = vunpack.c.l.b16 %v2355
        %v2456 = vpack.c.b16 %v2455, %v2455
        %2457 = vrot.lane.b32.xlu0 %v2456, 112
        %v2458 = vpop.permute.xlu0 %2457
        %v2460 = vunpack.c.l.b16 %v2414
        %v2461 = vpack.c.b16 %v2460, %v2460
        %2462 = vrot.lane.b32.xlu0 %v2461, 16
        %v2463 = vpop.permute.xlu0 %2462
        %v2465 = vunpack.c.l.b16 %v2388
        %v2466 = vpack.c.b16 %v2465, %v2465
        %2467 = vrot.lane.b32.xlu0 %v2466, 32
        %v2468 = vpop.permute.xlu0 %2467
        %v2470 = vunpack.c.l.b16 %v2422
        %v2471 = vpack.c.b16 %v2470, %v2470
        %2472 = vrot.lane.b32.xlu0 %v2471, 48
        %v2473 = vpop.permute.xlu0 %2472
        %v2475 = vunpack.c.l.b16 %v2387
        %v2476 = vpack.c.b16 %v2475, %v2475
        %2477 = vrot.lane.b32.xlu0 %v2476, 64
        %v2478 = vpop.permute.xlu0 %2477
        %v2480 = vunpack.c.l.b16 %v2421
        %v2481 = vpack.c.b16 %v2480, %v2480
        %2482 = vrot.lane.b32.xlu0 %v2481, 80
        %v2483 = vpop.permute.xlu0 %2482
        %v2485 = vunpack.c.l.b16 %v2389
        %v2486 = vpack.c.b16 %v2485, %v2485
        %2487 = vrot.lane.b32.xlu0 %v2486, 96
        %v2488 = vpop.permute.xlu0 %2487
        %v2490 = vunpack.c.l.b16 %v2423
        %v2491 = vpack.c.b16 %v2490, %v2490
        %2492 = vrot.lane.b32.xlu0 %v2491, 112
        %v2493 = vpop.permute.xlu0 %2492
        %v2496 = vsel %vm461, %v2312, %v2428
        %v2498 = vsel %vm465, %v2496, %v2433
        %v2500 = vsel %vm468, %v2498, %v2438
        %v2502 = vsel %vm471, %v2500, %v2443
        %v2504 = vsel %vm474, %v2502, %v2448
        %v2506 = vsel %vm477, %v2504, %v2453
        %v2508 = vsel %vm480, %v2506, %v2458
        %v2511 = vsel %vm461, %v2380, %v2463
        %v2513 = vsel %vm465, %v2511, %v2468
        %v2515 = vsel %vm468, %v2513, %v2473
        %v2517 = vsel %vm471, %v2515, %v2478
        %v2519 = vsel %vm474, %v2517, %v2483
        %v2521 = vsel %vm477, %v2519, %v2488
        %v2523 = vsel %vm480, %v2521, %v2493
        %2524 = vrot.lane.b32.xlu0 %v1963, 126
        %v2525 = vpop.permute.xlu0 %2524
        %2526 = vrot.lane.b32.xlu0 %v1966, 126
        %v2527 = vpop.permute.xlu0 %2526
        %2528 = vrot.lane.b32.xlu0 %v1970, 126
        %v2529 = vpop.permute.xlu0 %2528
        %2530 = vrot.lane.b32.xlu0 %v1973, 126
        %v2531 = vpop.permute.xlu0 %2530
        %2532 = vrot.lane.b32.xlu0 %v1977, 126
        %v2533 = vpop.permute.xlu0 %2532
        %2534 = vrot.lane.b32.xlu0 %v1980, 126
        %v2535 = vpop.permute.xlu0 %2534
        %2536 = vrot.lane.b32.xlu0 %v1984, 126
        %v2537 = vpop.permute.xlu0 %2536
        %2538 = vrot.lane.b32.xlu0 %v1987, 126
        %v2539 = vpop.permute.xlu0 %2538
        %v2542 = vpack.i.b16 %v2529, %v2525
        %v2543 = vshrl.u32 %v2525, 16
        %v2544 = vshrl.u32 %v2529, 16
        %v2545 = vpack.i.b16 %v2544, %v2543
        %v2548 = vpack.i.b16 %v2537, %v2533
        %v2549 = vshrl.u32 %v2533, 16
        %v2550 = vshrl.u32 %v2537, 16
        %v2551 = vpack.i.b16 %v2550, %v2549
        %v2554 = vpack.i.b16 %v2531, %v2527
        %v2555 = vshrl.u32 %v2527, 16
        %v2556 = vshrl.u32 %v2531, 16
        %v2557 = vpack.i.b16 %v2556, %v2555
        %v2560 = vpack.i.b16 %v2539, %v2535
        %v2561 = vshrl.u32 %v2535, 16
        %v2562 = vshrl.u32 %v2539, 16
        %v2563 = vpack.i.b16 %v2562, %v2561
        %v2566 = vunpack.c.l.s4 1983009808
        %v2567 = vunpack.c.0.s8 %v2566
        %v2568 = vlaneseq
        %v2569 = vshrl.u32 %v2568, 7
        %v2570 = vsub.s32 %v2567, %v2569
        %v2571 = vrot.slane %v2542, %v2570
        %v2574 = vunpack.c.l.s4 1983009808
        %v2575 = vunpack.c.0.s8 %v2574
        %v2576 = vlaneseq
        %v2577 = vshrl.u32 %v2576, 7
        %v2578 = vsub.s32 %v2575, %v2577
        %v2579 = vrot.slane %v2548, %v2578
        %v2580 = vcombine.low %v2571, %v2579
        %v2581 = vcombine.high %v2571, %v2579
        %v2583 = vunpack.c.l.s4 1934713408
        %v2584 = vunpack.c.0.s8 %v2583
        %v2585 = vlaneseq
        %v2586 = vshrl.u32 %v2585, 7
        %v2587 = vsub.s32 %v2584, %v2586
        %v2588 = vrot.slane %v2580, %v2587
        %v2590 = vunpack.c.l.s4 1934713408
        %v2591 = vunpack.c.0.s8 %v2590
        %v2592 = vlaneseq
        %v2593 = vshrl.u32 %v2592, 7
        %v2594 = vsub.s32 %v2591, %v2593
        %v2595 = vrot.slane %v2581, %v2594
        %v2596 = vcombine.high %v2588, 0
        %v2597 = vcombine.high %v2595, 0
        %v2600 = vunpack.c.l.s4 1983009808
        %v2601 = vunpack.c.0.s8 %v2600
        %v2602 = vlaneseq
        %v2603 = vshrl.u32 %v2602, 7
        %v2604 = vsub.s32 %v2601, %v2603
        %v2605 = vrot.slane %v2545, %v2604
        %v2608 = vunpack.c.l.s4 1983009808
        %v2609 = vunpack.c.0.s8 %v2608
        %v2610 = vlaneseq
        %v2611 = vshrl.u32 %v2610, 7
        %v2612 = vsub.s32 %v2609, %v2611
        %v2613 = vrot.slane %v2551, %v2612
        %v2614 = vcombine.low %v2605, %v2613
        %v2615 = vcombine.high %v2605, %v2613
        %v2617 = vunpack.c.l.s4 1934713408
        %v2618 = vunpack.c.0.s8 %v2617
        %v2619 = vlaneseq
        %v2620 = vshrl.u32 %v2619, 7
        %v2621 = vsub.s32 %v2618, %v2620
        %v2622 = vrot.slane %v2614, %v2621
        %v2624 = vunpack.c.l.s4 1934713408
        %v2625 = vunpack.c.0.s8 %v2624
        %v2626 = vlaneseq
        %v2627 = vshrl.u32 %v2626, 7
        %v2628 = vsub.s32 %v2625, %v2627
        %v2629 = vrot.slane %v2615, %v2628
        %v2630 = vcombine.high %v2622, 0
        %v2631 = vcombine.high %v2629, 0
        %v2634 = vunpack.c.l.s4 1983009808
        %v2635 = vunpack.c.0.s8 %v2634
        %v2636 = vlaneseq
        %v2637 = vshrl.u32 %v2636, 7
        %v2638 = vsub.s32 %v2635, %v2637
        %v2639 = vrot.slane %v2554, %v2638
        %v2642 = vunpack.c.l.s4 1983009808
        %v2643 = vunpack.c.0.s8 %v2642
        %v2644 = vlaneseq
        %v2645 = vshrl.u32 %v2644, 7
        %v2646 = vsub.s32 %v2643, %v2645
        %v2647 = vrot.slane %v2560, %v2646
        %v2648 = vcombine.low %v2639, %v2647
        %v2649 = vcombine.high %v2639, %v2647
        %v2651 = vunpack.c.l.s4 1934713408
        %v2652 = vunpack.c.0.s8 %v2651
        %v2653 = vlaneseq
        %v2654 = vshrl.u32 %v2653, 7
        %v2655 = vsub.s32 %v2652, %v2654
        %v2656 = vrot.slane %v2648, %v2655
        %v2658 = vunpack.c.l.s4 1934713408
        %v2659 = vunpack.c.0.s8 %v2658
        %v2660 = vlaneseq
        %v2661 = vshrl.u32 %v2660, 7
        %v2662 = vsub.s32 %v2659, %v2661
        %v2663 = vrot.slane %v2649, %v2662
        %v2664 = vcombine.high %v2656, 0
        %v2665 = vcombine.high %v2663, 0
        %v2668 = vunpack.c.l.s4 1983009808
        %v2669 = vunpack.c.0.s8 %v2668
        %v2670 = vlaneseq
        %v2671 = vshrl.u32 %v2670, 7
        %v2672 = vsub.s32 %v2669, %v2671
        %v2673 = vrot.slane %v2557, %v2672
        %v2676 = vunpack.c.l.s4 1983009808
        %v2677 = vunpack.c.0.s8 %v2676
        %v2678 = vlaneseq
        %v2679 = vshrl.u32 %v2678, 7
        %v2680 = vsub.s32 %v2677, %v2679
        %v2681 = vrot.slane %v2563, %v2680
        %v2682 = vcombine.low %v2673, %v2681
        %v2683 = vcombine.high %v2673, %v2681
        %v2685 = vunpack.c.l.s4 1934713408
        %v2686 = vunpack.c.0.s8 %v2685
        %v2687 = vlaneseq
        %v2688 = vshrl.u32 %v2687, 7
        %v2689 = vsub.s32 %v2686, %v2688
        %v2690 = vrot.slane %v2682, %v2689
        %v2692 = vunpack.c.l.s4 1934713408
        %v2693 = vunpack.c.0.s8 %v2692
        %v2694 = vlaneseq
        %v2695 = vshrl.u32 %v2694, 7
        %v2696 = vsub.s32 %v2693, %v2695
        %v2697 = vrot.slane %v2683, %v2696
        %v2698 = vcombine.high %v2690, 0
        %v2699 = vcombine.high %v2697, 0
        %v2701 = vunpack.c.l.b16 %v2622
        %v2702 = vpack.c.b16 %v2701, %v2701
        %2703 = vrot.lane.b32.xlu0 %v2702, 16
        %v2704 = vpop.permute.xlu0 %2703
        %v2706 = vunpack.c.l.b16 %v2596
        %v2707 = vpack.c.b16 %v2706, %v2706
        %2708 = vrot.lane.b32.xlu0 %v2707, 32
        %v2709 = vpop.permute.xlu0 %2708
        %v2711 = vunpack.c.l.b16 %v2630
        %v2712 = vpack.c.b16 %v2711, %v2711
        %2713 = vrot.lane.b32.xlu0 %v2712, 48
        %v2714 = vpop.permute.xlu0 %2713
        %v2716 = vunpack.c.l.b16 %v2595
        %v2717 = vpack.c.b16 %v2716, %v2716
        %2718 = vrot.lane.b32.xlu0 %v2717, 64
        %v2719 = vpop.permute.xlu0 %2718
        %v2721 = vunpack.c.l.b16 %v2629
        %v2722 = vpack.c.b16 %v2721, %v2721
        %2723 = vrot.lane.b32.xlu0 %v2722, 80
        %v2724 = vpop.permute.xlu0 %2723
        %v2726 = vunpack.c.l.b16 %v2597
        %v2727 = vpack.c.b16 %v2726, %v2726
        %2728 = vrot.lane.b32.xlu0 %v2727, 96
        %v2729 = vpop.permute.xlu0 %2728
        %v2731 = vunpack.c.l.b16 %v2631
        %v2732 = vpack.c.b16 %v2731, %v2731
        %2733 = vrot.lane.b32.xlu0 %v2732, 112
        %v2734 = vpop.permute.xlu0 %2733
        %v2736 = vunpack.c.l.b16 %v2690
        %v2737 = vpack.c.b16 %v2736, %v2736
        %2738 = vrot.lane.b32.xlu0 %v2737, 16
        %v2739 = vpop.permute.xlu0 %2738
        %v2741 = vunpack.c.l.b16 %v2664
        %v2742 = vpack.c.b16 %v2741, %v2741
        %2743 = vrot.lane.b32.xlu0 %v2742, 32
        %v2744 = vpop.permute.xlu0 %2743
        %v2746 = vunpack.c.l.b16 %v2698
        %v2747 = vpack.c.b16 %v2746, %v2746
        %2748 = vrot.lane.b32.xlu0 %v2747, 48
        %v2749 = vpop.permute.xlu0 %2748
        %v2751 = vunpack.c.l.b16 %v2663
        %v2752 = vpack.c.b16 %v2751, %v2751
        %2753 = vrot.lane.b32.xlu0 %v2752, 64
        %v2754 = vpop.permute.xlu0 %2753
        %v2756 = vunpack.c.l.b16 %v2697
        %v2757 = vpack.c.b16 %v2756, %v2756
        %2758 = vrot.lane.b32.xlu0 %v2757, 80
        %v2759 = vpop.permute.xlu0 %2758
        %v2761 = vunpack.c.l.b16 %v2665
        %v2762 = vpack.c.b16 %v2761, %v2761
        %2763 = vrot.lane.b32.xlu0 %v2762, 96
        %v2764 = vpop.permute.xlu0 %2763
        %v2766 = vunpack.c.l.b16 %v2699
        %v2767 = vpack.c.b16 %v2766, %v2766
        %2768 = vrot.lane.b32.xlu0 %v2767, 112
        %v2769 = vpop.permute.xlu0 %2768
        %v2772 = vsel %vm461, %v2588, %v2704
        %v2774 = vsel %vm465, %v2772, %v2709
        %v2776 = vsel %vm468, %v2774, %v2714
        %v2778 = vsel %vm471, %v2776, %v2719
        %v2780 = vsel %vm474, %v2778, %v2724
        %v2782 = vsel %vm477, %v2780, %v2729
        %v2784 = vsel %vm480, %v2782, %v2734
        %v2787 = vsel %vm461, %v2656, %v2739
        %v2789 = vsel %vm465, %v2787, %v2744
        %v2791 = vsel %vm468, %v2789, %v2749
        %v2793 = vsel %vm471, %v2791, %v2754
        %v2795 = vsel %vm474, %v2793, %v2759
        %v2797 = vsel %vm477, %v2795, %v2764
        %v2799 = vsel %vm480, %v2797, %v2769
        %v2802 = vrot.slane %v766, 6
        %v2803 = vrot.slane %v781, 6
        %v2806 = vrot.slane %v1042, 4
        %v2807 = vrot.slane %v1057, 4
        %v2810 = vrot.slane %v1385, 2
        %v2811 = vrot.slane %v1400, 2
        %v2814 = vrot.slane %v1937, 6
        %v2815 = vrot.slane %v1952, 6
        %v2818 = vrot.slane %v2232, 4
        %v2819 = vrot.slane %v2247, 4
        %v2822 = vrot.slane %v2508, 2
        %v2823 = vrot.slane %v2523, 2
        %vm2824 = vcmask 1041408
        %v2826 = vsel %vm2824, %v482, %v2802
        %v2828 = vsel %vm2824, %v497, %v2803
        %vm2829 = vcmask 1043456
        %v2831 = vsel %vm2829, %v2826, %v2806
        %v2833 = vsel %vm2829, %v2828, %v2807
        %vm2834 = vcmask 1045504
        %v2836 = vsel %vm2834, %v2831, %v2810
        %v2839 = vsel %vm2834, %v2833, %v2811
        %v2842 = vsel %vm2824, %v1661, %v2814
        %v2844 = vsel %vm2824, %v1676, %v2815
        %v2846 = vsel %vm2829, %v2842, %v2818
        %v2848 = vsel %vm2829, %v2844, %v2819
        %v2850 = vsel %vm2834, %v2846, %v2822
        %v2853 = vsel %vm2834, %v2848, %v2823
        %v2855 = vld [vmem:[%s1] sm:$0xf]
        %v2856 = vld [vmem:[%s1 + $0x4] sm:$0xf]
        %v2859 = vunpack.c.l.b16 %v2855
        %v2860 = vunpack.c.l.b16 %v2856
        %v2861 = vpack.c.b16 %v2860, %v2859
        %vm2862 = vcmask 293888
        %v2864 = vsel %vm2862, %v2861, 0
        %v2866 = vsel %vm2824, %v2784, 0
        %v2868 = vsel %vm2824, %v2799, 0
        %2870 = vmatprep.subr.bf16.mxu0 %v2839
        %2871 = vmatpush1.bf16.msra.mxu0 %v2836
        %2872 = vmatprep.subr.bf16.mxu0 %v2853
        %2873 = vmatpush1.bf16.msra.mxu0 %v2850
        %2874 = vmatprep.subr.bf16.mxu0 %v2868
        %2875 = vmatpush1.bf16.msra.mxu0 %v2866
        %2876 = vmatprep.subr.bf16.mxu0 0
        %2877 = vmatpush1.bf16.msra.mxu0 0
        %2878 = vmatprep.subr.bf16.mxu0 0
        %2879 = vmatpush1.bf16.msra.mxu0 0
        %2880 = vmatprep.subr.bf16.mxu0 0
        %2881 = vmatpush1.bf16.msra.mxu0 0
        %2882 = vmatprep.subr.bf16.mxu0 0
        %2883 = vmatpush1.bf16.msra.mxu0 0
        %2884 = vmatprep.subr.bf16.mxu0 0
        %2885 = vmatpush1.bf16.msra.mxu0 0
        %2886 = vmatprep.subr.bf16.mxu0 0
        %2887 = vmatpush1.bf16.msra.mxu0 0
        %2888 = vmatprep.subr.bf16.mxu0 0
        %2889 = vmatpush1.bf16.msra.mxu0 0
        %2890 = vmatprep.subr.bf16.mxu0 0
        %2891 = vmatpush1.bf16.msra.mxu0 0
        %2892 = vmatprep.subr.bf16.mxu0 0
        %2893 = vmatpush1.bf16.msra.mxu0 0
        %2894 = vmatprep.subr.bf16.mxu0 0
        %2895 = vmatpush1.bf16.msra.mxu0 0
        %2896 = vmatprep.subr.bf16.mxu0 0
        %2897 = vmatpush1.bf16.msra.mxu0 0
        %2898 = vmatprep.subr.bf16.mxu0 0
        %2899 = vmatpush1.bf16.msra.mxu0 0
        %2900 = vmatprep.subr.bf16.mxu0 0
        %2901 = vmatpush1.bf16.msra.mxu0 0
        %2902 = vmatprep.mubr.bf16.mxu0 0
        %2903 = vmatmul.mubr.bf16.gmra.mrb[0].mxu0 %v2864
        %v2904 = vpop.f32.mrb[0].mxu0
        %v2905 = vadd.f32 0.0, %v2904
        %v2906 = vpop.f32.mrb[0].mxu0
        %v2907 = vadd.f32 0.0, %v2906
        %v2908 = vpop.f32.mrb[0].mxu0
        %v2909 = vadd.f32 0.0, %v2908
        %v2910 = vpop.f32.mrb[0].mxu0
        %v2911 = vadd.f32 0.0, %v2910
        %2912 = vdwg.mxu0
        %vm2913 = vcmp.gt.f32.partialorder %v2905, 0.0
        %vm2914 = vcmp.gt.f32.partialorder %v2907, 0.0
        %vm2915 = vcmp.gt.f32.partialorder %v2909, 0.0
        %vm2916 = vcmp.gt.f32.partialorder %v2911, 0.0
        %v2917 = vmin.f32 %v2905, 0.0
        %v2918 = vmin.f32 %v2907, 0.0
        %v2919 = vmin.f32 %v2909, 0.0
        %v2920 = vmin.f32 %v2911, 0.0
        %v2921 = vmul.f32 %v2917, 1.442695
        %v2922 = vpow.pop %v2921
        %v2923 = vmul.f32 %v2918, 1.442695
        %v2924 = vpow.pop %v2923
        %v2925 = vmul.f32 %v2919, 1.442695
        %v2926 = vpow.pop %v2925
        %v2927 = vmul.f32 %v2920, 1.442695
        %v2928 = vpow.pop %v2927
        %v2929 = vsub.f32 %v2922, 1.0
        %v2930 = vsub.f32 %v2924, 1.0
        %v2931 = vsub.f32 %v2926, 1.0
        %v2932 = vsub.f32 %v2928, 1.0
        %v2933 = vsel %vm2913, %v2905, %v2929
        %v2934 = vsel %vm2914, %v2907, %v2930
        %v2935 = vsel %vm2915, %v2909, %v2931
        %v2936 = vsel %vm2916, %v2911, %v2932
        %v2937 = vadd.f32 %v2933, %v2934
        %2938 = vadd.xlane.f32.xlu0 %v2937
        %v2939 = vpop.xlane.xlu0 %2938
        %v2940 = vadd.f32 %v2935, %v2936
        %2941 = vadd.xlane.f32.xlu0 %v2940
        %v2942 = vpop.xlane.xlu0 %2941
        %v2943 = vmul.f32 %v2933, %v2933
        %v2944 = vmul.f32 %v2934, %v2934
        %v2945 = vmul.f32 %v2935, %v2935
        %v2946 = vmul.f32 %v2936, %v2936
        %v2947 = vadd.f32 %v2943, %v2944
        %2948 = vadd.xlane.f32.xlu0 %v2947
        %v2949 = vpop.xlane.xlu0 %2948
        %v2950 = vadd.f32 %v2945, %v2946
        %2951 = vadd.xlane.f32.xlu0 %v2950
        %v2952 = vpop.xlane.xlu0 %2951
        %vm2953 = vcmask 7168
        %v2954 = vsel %vm2953, %v2939, %v2949
        %v2955 = vsel %vm2953, %v2942, %v2952
        %vm2956 = vcmask 15360
        %2957 = vst.msk [vmem:[%s217] sm:$0xff] %vm2956, %v2954
        %2958 = vst.msk [vmem:[%s217 + $0x8] sm:$0xff] %vm2956, %v2955
        %v2959 = vpack.c.bf16 %v2935, %v2933
        %v2960 = vpack.c.bf16 %v2936, %v2934
        %v2963 = vunpack.c.l.b16 %v2959
        %v2964 = vunpack.c.l.b16 %v2960
        %v2965 = vunpack.c.h.b16 %v2959
        %v2966 = vunpack.c.h.b16 %v2960
        %v2967 = vpack.c.b16 %v2964, %v2963
        %v2968 = vpack.c.b16 %v2966, %v2965
        %2971 = vst [vmem:[%s186] sm:$0xff] %v2967
        %2972 = vst [vmem:[%s186 + $0x8] sm:$0xff] %v2968
        %s2973 = sand.u32 %s86, 1
        %s2974 = sand.u32 %s86, 1
        %s2975 = smul.addr %s2974, 16
        %s2976 = scalar_lea.vmem [#allocation2], %s2975
        %p2977 = scmp.lt.s32.totalorder %s19, 1
        %s2978 = scalar_select %p2977, %s19, 1
        %p2979 = scmp.lt.s32.totalorder %s20, 0
        %s2980 = scalar_select %p2979, %s20, 0
        %s2981 = smul.addr %s2980, 2
        %s2982 = smul.addr %s2978, 2
        %s2983 = sadd.s32 %s2981, %s2982
        %s2984 = smul.addr %s2983, 8
        %s2985 = scalar_lea.vmem %s3, %s2984
        // Predicated region
        $region29: #{deconv_layer_forward.1} parent=27 // pred_check
          %p2986 = pneg %p96
        $region30: #{deconv_layer_forward.1} parent=27 // pred_check_branch
          %2988 = sbr.rel (%p2986) target = $region32
        $region31: #{deconv_layer_forward.1} parent=27 // pred_region
          %s2989 = sadd.s32 %s19, %s20
          %s2990 = smul.u32 2, %s2989
          %s2991 = smul.addr %s2990, 4
          %s2992 = scalar_lea.vmem %s2, %s2991
          // Predicated region
          $region33: #{deconv_layer_forward.1} parent=31 // pred_check
            _
          $region34: #{deconv_layer_forward.1} parent=31 // pred_check_branch
            %2994 = sbr.rel (0) target = $region36
          $region35: #{deconv_layer_forward.1} parent=31 // pred_region
            // Predicated region
            $region37: #{deconv_layer_forward.1} parent=35 // pred_check
              _
            $region38: #{deconv_layer_forward.1} parent=35 // pred_check_branch
              %2996 = sbr.rel (0) target = $region40
            $region39: #{deconv_layer_forward.1} parent=35 // pred_region
              // Predicated region
              $region52: #{deconv_layer_forward.1} parent=39 // pred_check
                _
              $region53: #{deconv_layer_forward.1} parent=39 // pred_check_branch
                %3013 = sbr.rel (0) target = $region55
              $region54: #{deconv_layer_forward.1} parent=39 // pred_region
                loop: start=0, step=1, limit=1
                $region56: #{deconv_layer_forward.1} parent=54 // loop_pre_header
                  _
                $region57: #{deconv_layer_forward.1} parent=54 // loop_header
                  %s3015 = sphi 0, %s3019
                  %p3016 = scmp.ge.s32.totalorder %s3015, 1
                  %s3020 = sphi %s2976, %s2976
                  %s3021 = sphi %s2992, %s2992
                $region58: #{deconv_layer_forward.1} parent=54 // loop_header_branch
                  %3018 = sbr.rel (%p3016) target = $region62
                $region59: #{deconv_layer_forward.1} parent=54 // loop_body
                  %v3022 = vld [vmem:[%s3020] sm:$0xff]
                  %3023 = vst [vmem:[%s3021] sm:$0xff] %v3022
                  %v3024 = vld [vmem:[%s3020 + $0x8] sm:$0xff]
                  %3025 = vst [vmem:[%s3021 + $0x10] sm:$0xff] %v3024
                $region60: #{deconv_layer_forward.1} parent=54 // loop_footer
                  %s3019 = sadd.s32 1, %s3015
                $region61: #{deconv_layer_forward.1} parent=54 // loop_footer_branch
                  %3014 = sbr.rel target = $region57
                $region62: #{deconv_layer_forward.1} parent=54 // loop_exit
                  _
              $region55: #{deconv_layer_forward.1} parent=39 // pred_fallthru
                _
              // Predicated region
              $region63: #{deconv_layer_forward.1} parent=39 // pred_check
                _
              $region64: #{deconv_layer_forward.1} parent=39 // pred_check_branch
                %3027 = sbr.rel target = $region66
              $region65: #{deconv_layer_forward.1} parent=39 // pred_region
                _
              $region66: #{deconv_layer_forward.1} parent=39 // pred_fallthru
                _
            $region40: #{deconv_layer_forward.1} parent=35 // pred_fallthru
              _
            // Predicated region
            $region41: #{deconv_layer_forward.1} parent=35 // pred_check
              _
            $region42: #{deconv_layer_forward.1} parent=35 // pred_check_branch
              %2998 = sbr.rel target = $region44
            $region43: #{deconv_layer_forward.1} parent=35 // pred_region
              loop: start=0, step=1, limit=1
              $region45: #{deconv_layer_forward.1} parent=43 // loop_pre_header
                _
              $region46: #{deconv_layer_forward.1} parent=43 // loop_header
                %s3001 = sphi 0, %s3005
                %p3002 = scmp.ge.s32.totalorder %s3001, 1
                %s3006 = sphi %s2976, %s2976
                %s3007 = sphi %s2992, %s2992
              $region47: #{deconv_layer_forward.1} parent=43 // loop_header_branch
                %3004 = sbr.rel (%p3002) target = $region51
              $region48: #{deconv_layer_forward.1} parent=43 // loop_body
                %v3008 = vld [vmem:[%s3006] sm:$0xff]
                %3009 = vst [vmem:[%s3007] sm:$0xff] %v3008
                %v3010 = vld [vmem:[%s3006 + $0x8] sm:$0xff]
                %3011 = vst [vmem:[%s3007 + $0x10] sm:$0xff] %v3010
              $region49: #{deconv_layer_forward.1} parent=43 // loop_footer
                %s3005 = sadd.s32 1, %s3001
              $region50: #{deconv_layer_forward.1} parent=43 // loop_footer_branch
                %3000 = sbr.rel target = $region46
              $region51: #{deconv_layer_forward.1} parent=43 // loop_exit
                _
            $region44: #{deconv_layer_forward.1} parent=35 // pred_fallthru
              _
          $region36: #{deconv_layer_forward.1} parent=31 // pred_fallthru
            _
          %3028 = vnop
        $region32: #{deconv_layer_forward.1} parent=27 // pred_fallthru
          _
        // Predicated region
        $region67: #{deconv_layer_forward.1} parent=27 // pred_check
          %p3029 = pneg %p124
        $region68: #{deconv_layer_forward.1} parent=27 // pred_check_branch
          %3031 = sbr.rel (%p3029) target = $region70
        $region69: #{deconv_layer_forward.1} parent=27 // pred_region
          _
        $region70: #{deconv_layer_forward.1} parent=27 // pred_fallthru
          _
      $region28: #{deconv_layer_forward.1} parent=5 // pred_fallthru
        _
      %p3032 = scmp.le.s32.totalorder 2, %s10
      // Predicated region
      $region71: #{deconv_layer_forward.1} parent=5 // pred_check
        %p3033 = pneg %p3032
      $region72: #{deconv_layer_forward.1} parent=5 // pred_check_branch
        %3035 = sbr.rel (%p3033) target = $region74
      $region73: #{deconv_layer_forward.1} parent=5 // pred_region
        %s3036 = ssub.s32 %s10, 2
        // Predicated region
        $region75: #{deconv_layer_forward.1} parent=73 // pred_check
          %p3037 = pneg %p102
        $region76: #{deconv_layer_forward.1} parent=73 // pred_check_branch
          %3039 = sbr.rel (%p3037) target = $region78
        $region77: #{deconv_layer_forward.1} parent=73 // pred_region
          %s3040 = sand.u32 %s87, 1
          %s3041 = sand.u32 %s87, 1
          %s3042 = smul.addr %s3041, 16
          %s3043 = scalar_lea.vmem [#allocation2], %s3042
        $region78: #{deconv_layer_forward.1} parent=73 // pred_fallthru
          _
        // Predicated region
        $region79: #{deconv_layer_forward.1} parent=73 // pred_check
          %p3044 = pneg %p130
        $region80: #{deconv_layer_forward.1} parent=73 // pred_check_branch
          %3046 = sbr.rel (%p3044) target = $region82
        $region81: #{deconv_layer_forward.1} parent=73 // pred_region
          %p3047 = scmp.lt.s32.totalorder %s21, 1
          %s3048 = scalar_select %p3047, %s21, 1
          %p3049 = scmp.lt.s32.totalorder %s22, 0
          %s3050 = scalar_select %p3049, %s22, 0
          %s3051 = smul.addr %s3050, 2
          %s3052 = smul.addr %s3048, 2
          %s3053 = sadd.s32 %s3051, %s3052
          %s3054 = smul.addr %s3053, 8
          %s3055 = scalar_lea.vmem %s3, %s3054
        $region82: #{deconv_layer_forward.1} parent=73 // pred_fallthru
          _
      $region74: #{deconv_layer_forward.1} parent=5 // pred_fallthru
        _
    $region6: #{deconv_layer_forward.1} parent=1 // loop_footer
      %s14 = sadd.s32 1, %s10
    $region7: #{deconv_layer_forward.1} parent=1 // loop_footer_branch
      %9 = sbr.rel target = $region3
    $region8: #{deconv_layer_forward.1} parent=1 // loop_exit
      _

</llo_original>
